<compile_context>
chip_gen: v7x
topology: tpu7x:2x2x1
jax: 0.10.0
libtpu: 0.0.40
codegen_flags: <defaults>
</compile_context>

<pallas_src>
import functools
from collections import namedtuple

import numpy as np
import jax
import jax.numpy as jnp
from jax import lax
from jax.experimental import pallas as pl
from jax.experimental.pallas import tpu as pltpu

ListaParams = namedtuple(
    "ListaParams",
    ["kernel_size", "num_filters", "stride", "unfoldings", "threshold", "multi_lmbda"],
)


def _round_up(x, m):
    return ((x + m - 1) // m) * m


# ----------------------------------------------------------------------------
# Glue: Im2Col / Col2Im (match torch.nn.Unfold / Fold semantics, padding=0)
# ----------------------------------------------------------------------------
def im2col(x, k, stride):
    """x: (B, C, H, W) -> (B, C*k*k, h_out, w_out), channel-major patch ordering."""
    B, C, H, W = x.shape
    h = (H - k) // stride + 1
    w = (W - k) // stride + 1
    patches = []
    for ki in range(k):
        for kj in range(k):
            patches.append(x[:, :, ki:ki + stride * h:stride, kj:kj + stride * w:stride])
    p = jnp.stack(patches, axis=2)            # (B, C, k*k, h, w)
    return p.reshape(B, C * k * k, h, w)


def col2im(cols, out_hw, k, stride):
    """cols: (B, C*k*k, h, w) -> (B, C, H, W), overlap-averaged (avg=True)."""
    B, CKK, h, w = cols.shape
    C = CKK // (k * k)
    H, W = out_hw
    cols = cols.reshape(B, C, k, k, h, w)
    out = jnp.zeros((B, C, H, W), cols.dtype)
    cnt = jnp.zeros((B, C, H, W), cols.dtype)
    for ki in range(k):
        for kj in range(k):
            sl = (slice(None), slice(None),
                  slice(ki, ki + stride * h, stride),
                  slice(kj, kj + stride * w, stride))
            out = out.at[sl].add(cols[:, :, ki, kj])
            cnt = cnt.at[sl].add(1.0)
    return out / cnt


# ----------------------------------------------------------------------------
# Pallas kernel: all LISTA unfoldings (1x1 convs == matmuls + soft-threshold)
# ----------------------------------------------------------------------------
def _lista_kernel(icol_ref, mask_ref, d_ref, lmbda_ref, out_ref,
                  *, unfoldings, multi_lmbda, inv_cin):
    icol = icol_ref[...]          # (tn, Cp)   zero-padded lanes beyond real Cin
    msk = mask_ref[...]           # (tn, Cp)
    D = d_ref[...]                # (Cp, Fp)   zero-padded beyond (Cin, F)

    # Centered patches. Padded lanes are zero, so sum over all lanes equals the
    # sum over the real Cin lanes; divide by the *original* Cin.
    mean_patch = jnp.sum(icol, axis=-1, keepdims=True) * inv_cin   # (tn, 1)
    icol_c = icol - mean_patch
    masked_ic = msk * icol_c      # mask zeroes the padded lanes again

    def soft(x, lm):
        # fastSoftThrs(x, l) = x + 0.5*(|x - l| - |x + l|)
        return x + 0.5 * (jnp.abs(x - lm) - jnp.abs(x + lm))

    def lmbda_at(k):
        idx = k if multi_lmbda else 0
        return lmbda_ref[idx:idx + 1, :]                   # (1, Fp)

    # contract gamma's F axis against D's F axis  ==  gamma @ D^T without a
    # materialized transpose.
    dn_bwd = (((1,), (1,)), ((), ()))

    # gamma_0
    lin = jnp.dot(masked_ic, D, preferred_element_type=jnp.float32)   # (tn, Fp)
    gamma = soft(lin, lmbda_at(0))

    # unfoldings - 1 iterations (statically unrolled; fine for small counts)
    # TODO(synk): switch to lax.fori_loop with pl.ds-indexed lmbda if unfoldings > 8.
    for k in range(unfoldings - 1):
        x_k = lax.dot_general(gamma, D, dn_bwd,
                              preferred_element_type=jnp.float32)     # (tn, Cp)
        res = x_k * msk - masked_ic
        r_k = jnp.dot(res, D, preferred_element_type=jnp.float32)     # (tn, Fp)
        gamma = soft(gamma - r_k, lmbda_at(k + 1))

    out_all = lax.dot_general(gamma, D, dn_bwd,
                              preferred_element_type=jnp.float32)     # (tn, Cp)
    out_ref[...] = out_all + mean_patch


def lista_pallas(icol_flat, mcol_flat, D, lmbda, *,
                 unfoldings, multi_lmbda, tile_n=2048):
    N, Cin = icol_flat.shape
    Cin2, F = D.shape
    assert Cin2 == Cin

    # Lane-dense padding (128 lanes) + 128-aligned row tiling.
    Cp = _round_up(Cin, 128)
    Fp = _round_up(F, 128)
    tile_n = max(128, min(_round_up(tile_n, 128), _round_up(N, 128)))
    N_pad = _round_up(N, tile_n)

    icol_p = jnp.zeros((N_pad, Cp), jnp.float32).at[:N, :Cin].set(icol_flat)
    mcol_p = jnp.zeros((N_pad, Cp), jnp.float32).at[:N, :Cin].set(mcol_flat)
    D_p = jnp.zeros((Cp, Fp), jnp.float32).at[:Cin, :F].set(D)

    n_l = lmbda.shape[0]
    n_lp = _round_up(n_l, 8)
    lmbda_p = jnp.zeros((n_lp, Fp), jnp.float32).at[:n_l, :F].set(lmbda)

    kernel = functools.partial(_lista_kernel,
                               unfoldings=unfoldings,
                               multi_lmbda=multi_lmbda,
                               inv_cin=1.0 / Cin)

    out_p = pl.pallas_call(
        kernel,
        out_shape=jax.ShapeDtypeStruct((N_pad, Cp), jnp.float32),
        grid_spec=pltpu.PrefetchScalarGridSpec(
            num_scalar_prefetch=0,
            grid=(N_pad // tile_n,),
            in_specs=[
                pl.BlockSpec((tile_n, Cp), lambda i: (i, 0)),
                pl.BlockSpec((tile_n, Cp), lambda i: (i, 0)),
                pl.BlockSpec((Cp, Fp), lambda i: (0, 0)),      # resident D
                pl.BlockSpec((n_lp, Fp), lambda i: (0, 0)),    # resident lmbda
            ],
            out_specs=pl.BlockSpec((tile_n, Cp), lambda i: (i, 0)),
        ),
        compiler_params=pltpu.CompilerParams(
            dimension_semantics=("parallel",)),
    )(icol_p, mcol_p, D_p, lmbda_p)

    return out_p[:N, :Cin]


# ----------------------------------------------------------------------------
# Full forward pass (glue in JAX, hot path in Pallas)
# ----------------------------------------------------------------------------
def lista_forward(I, mask, D, lmbda, params: ListaParams, tile_n=2048):
    k, s = params.kernel_size, params.stride
    B, C, H, W = I.shape
    I_col = im2col(I, k, s)            # (B, Ckk, h, w)
    M_col = im2col(mask, k, s)
    _, Ckk, h, w = I_col.shape

    icol_flat = I_col.transpose(0, 2, 3, 1).reshape(-1, Ckk)
    mcol_flat = M_col.transpose(0, 2, 3, 1).reshape(-1, Ckk)

    out_flat = lista_pallas(icol_flat, mcol_flat, D, lmbda,
                            unfoldings=params.unfoldings,
                            multi_lmbda=params.multi_lmbda,
                            tile_n=tile_n)

    out_all = out_flat.reshape(B, h, w, Ckk).transpose(0, 3, 1, 2)
    return col2im(out_all, (H, W), k, s)


# ----------------------------------------------------------------------------
# Pure-JAX reference (mirrors the PyTorch forward exactly) for verification
# ----------------------------------------------------------------------------
def lista_reference(I, mask, D, lmbda, params: ListaParams):
    k, s = params.kernel_size, params.stride
    B, C, H, W = I.shape
    I_col = im2col(I, k, s)
    M_col = im2col(mask, k, s)

    def conv1x1(x, W2):   # x: (B, Cin, h, w), W2: (Cout, Cin)
        return jnp.einsum("oc,bchw->bohw", W2, x)

    def soft(x, lm):
        return x + 0.5 * (jnp.abs(x - lm) - jnp.abs(x + lm))

    A_w = D.T            # apply_A weight (F, Cin)
    D_w = D              # apply_D / apply_W weight (Cin, F)

    mean_patch = I_col.mean(axis=1, keepdims=True)
    I_c = I_col - mean_patch

    def lm_at(i):
        idx = i if params.multi_lmbda else 0
        return lmbda[idx][None, :, None, None]     # (1, F, 1, 1)

    gamma = soft(conv1x1(M_col * I_c, A_w), lm_at(0))
    for i in range(params.unfoldings - 1):
        x_k = conv1x1(gamma, D_w)
        res = (x_k - I_c) * M_col
        r_k = conv1x1(res, A_w)
        gamma = soft(gamma - r_k, lm_at(i + 1))
    out_all = conv1x1(gamma, D_w) + mean_patch
    return col2im(out_all, (H, W), k, s)


# ----------------------------------------------------------------------------
if __name__ == "__main__":
    params = ListaParams(kernel_size=4, num_filters=64, stride=2,
                         unfoldings=3, threshold=0.1, multi_lmbda=True)
    Cin = params.kernel_size ** 2 * 3   # 48
    F = params.num_filters              # 64

    key = jax.random.PRNGKey(0)
    k_d, k_i, k_m = jax.random.split(key, 3)

    # deterministic parameter init (same recipe as the module __init__)
    D = jax.random.normal(k_d, (Cin, F), jnp.float32)
    # spectral normalization: divide by sqrt(max eigenvalue of D^T D)
    l_max = float(np.linalg.norm(np.asarray(D), 2) ** 2)
    D = D / jnp.sqrt(l_max)

    n_lmbda = params.unfoldings if params.multi_lmbda else 1
    lmbda = jnp.full((n_lmbda, F), params.threshold, jnp.float32)

    # inputs: NCHW image + mask (stride 2 over 32x32 -> N = 2*15*15 = 450
    # patch rows -> padded to 512 -> a 4-step grid with tile_n=128)
    I = jax.random.normal(k_i, (2, 3, 32, 32), jnp.float32)
    mask = (jax.random.uniform(k_m, (2, 3, 32, 32)) > 0.5).astype(jnp.float32)

    out = lista_forward(I, mask, D, lmbda, params, tile_n=128)
    out = jax.block_until_ready(out)

    ref = jax.block_until_ready(lista_reference(I, mask, D, lmbda, params))
    if not np.allclose(np.asarray(out), np.asarray(ref), rtol=1e-4, atol=1e-4):
        raise AssertionError("Pallas kernel output does not match reference")

    print("KERNEL_OK")
</pallas_src>

<mosaic_0001>
module attributes {stable_mosaic.version = 11 : i64} {
  func.func @_lista_kernel(%arg0: i32, %arg1: memref<128x128xf32, #tpu.memory_space<vmem>>, %arg2: memref<128x128xf32, #tpu.memory_space<vmem>>, %arg3: memref<128x128xf32, #tpu.memory_space<vmem>>, %arg4: memref<8x128xf32, #tpu.memory_space<vmem>>, %arg5: memref<128x128xf32, #tpu.memory_space<vmem>>) attributes {dimension_semantics = [#tpu.dimension_semantics<parallel>], iteration_bounds = array<i64: 4>, scalar_prefetch = 0 : i64, scratch_operands = 0 : i64, tpu.core_type = #tpu.core_type<tc>, window_params = [{transform_indices = @transform_0, window_bounds = array<i64: 128, 128>}, {transform_indices = @transform_1, window_bounds = array<i64: 128, 128>}, {pipeline_mode = #tpu.pipeline_mode<synchronous>, transform_indices = @transform_2, window_bounds = array<i64: 128, 128>}, {pipeline_mode = #tpu.pipeline_mode<synchronous>, transform_indices = @transform_3, window_bounds = array<i64: 8, 128>}, {transform_indices = @transform_4, window_bounds = array<i64: 128, 128>}]} {
    %c0 = arith.constant 0 : index
    %c0_0 = arith.constant 0 : index
    %0 = vector.load %arg1[%c0, %c0_0] : memref<128x128xf32, #tpu.memory_space<vmem>>, vector<128x128xf32>
    %c0_1 = arith.constant 0 : index
    %c0_2 = arith.constant 0 : index
    %1 = vector.load %arg2[%c0_1, %c0_2] : memref<128x128xf32, #tpu.memory_space<vmem>>, vector<128x128xf32>
    %c0_3 = arith.constant 0 : index
    %c0_4 = arith.constant 0 : index
    %2 = vector.load %arg3[%c0_3, %c0_4] : memref<128x128xf32, #tpu.memory_space<vmem>>, vector<128x128xf32>
    %cst = arith.constant dense<0.000000e+00> : vector<128xf32>
    %3 = vector.multi_reduction <add>, %0, %cst [1] : vector<128x128xf32> to vector<128xf32>
    %4 = vector.shape_cast %3 : vector<128xf32> to vector<128x1xf32>
    %cst_5 = arith.constant 0.020833334 : f32
    %5 = vector.broadcast %cst_5 : f32 to vector<128x1xf32>
    %6 = arith.mulf %4, %5 : vector<128x1xf32>
    %7 = vector.broadcast %6 : vector<128x1xf32> to vector<128x128xf32>
    %8 = arith.subf %0, %7 : vector<128x128xf32>
    %9 = arith.mulf %1, %8 : vector<128x128xf32>
    %cst_6 = arith.constant dense<0.000000e+00> : vector<128x128xf32>
    %10 = tpu.matmul %9, %2, %cst_6 {dimension_numbers = #tpu.dot_dimension_numbers<[1], [0], [0], [1], [0, 0, 1, 1], [], []>} : vector<128x128xf32>, vector<128x128xf32>, vector<128x128xf32> -> vector<128x128xf32>
    %c0_7 = arith.constant 0 : index
    %c0_8 = arith.constant 0 : index
    %11 = vector.load %arg4[%c0_7, %c0_8] : memref<8x128xf32, #tpu.memory_space<vmem>>, vector<1x128xf32>
    %12 = vector.broadcast %11 : vector<1x128xf32> to vector<128x128xf32>
    %13 = arith.subf %10, %12 : vector<128x128xf32>
    %14 = math.absf %13 : vector<128x128xf32>
    %15 = vector.broadcast %11 : vector<1x128xf32> to vector<128x128xf32>
    %16 = arith.addf %10, %15 : vector<128x128xf32>
    %17 = math.absf %16 : vector<128x128xf32>
    %18 = arith.subf %14, %17 : vector<128x128xf32>
    %cst_9 = arith.constant 5.000000e-01 : f32
    %19 = vector.broadcast %cst_9 : f32 to vector<128x128xf32>
    %20 = arith.mulf %19, %18 : vector<128x128xf32>
    %21 = arith.addf %10, %20 : vector<128x128xf32>
    %cst_10 = arith.constant dense<0.000000e+00> : vector<128x128xf32>
    %22 = tpu.matmul %21, %2, %cst_10 {dimension_numbers = #tpu.dot_dimension_numbers<[1], [1], [0], [0], [0, 0, 1, 0], [], []>} : vector<128x128xf32>, vector<128x128xf32>, vector<128x128xf32> -> vector<128x128xf32>
    %23 = arith.mulf %22, %1 : vector<128x128xf32>
    %24 = arith.subf %23, %9 : vector<128x128xf32>
    %cst_11 = arith.constant dense<0.000000e+00> : vector<128x128xf32>
    %25 = tpu.matmul %24, %2, %cst_11 {dimension_numbers = #tpu.dot_dimension_numbers<[1], [0], [0], [1], [0, 0, 1, 1], [], []>} : vector<128x128xf32>, vector<128x128xf32>, vector<128x128xf32> -> vector<128x128xf32>
    %26 = arith.subf %21, %25 : vector<128x128xf32>
    %c1 = arith.constant 1 : index
    %c0_12 = arith.constant 0 : index
    %27 = vector.load %arg4[%c1, %c0_12] : memref<8x128xf32, #tpu.memory_space<vmem>>, vector<1x128xf32>
    %28 = vector.broadcast %27 : vector<1x128xf32> to vector<128x128xf32>
    %29 = arith.subf %26, %28 : vector<128x128xf32>
    %30 = math.absf %29 : vector<128x128xf32>
    %31 = vector.broadcast %27 : vector<1x128xf32> to vector<128x128xf32>
    %32 = arith.addf %26, %31 : vector<128x128xf32>
    %33 = math.absf %32 : vector<128x128xf32>
    %34 = arith.subf %30, %33 : vector<128x128xf32>
    %cst_13 = arith.constant 5.000000e-01 : f32
    %35 = vector.broadcast %cst_13 : f32 to vector<128x128xf32>
    %36 = arith.mulf %35, %34 : vector<128x128xf32>
    %37 = arith.addf %26, %36 : vector<128x128xf32>
    %cst_14 = arith.constant dense<0.000000e+00> : vector<128x128xf32>
    %38 = tpu.matmul %37, %2, %cst_14 {dimension_numbers = #tpu.dot_dimension_numbers<[1], [1], [0], [0], [0, 0, 1, 0], [], []>} : vector<128x128xf32>, vector<128x128xf32>, vector<128x128xf32> -> vector<128x128xf32>
    %39 = arith.mulf %38, %1 : vector<128x128xf32>
    %40 = arith.subf %39, %9 : vector<128x128xf32>
    %cst_15 = arith.constant dense<0.000000e+00> : vector<128x128xf32>
    %41 = tpu.matmul %40, %2, %cst_15 {dimension_numbers = #tpu.dot_dimension_numbers<[1], [0], [0], [1], [0, 0, 1, 1], [], []>} : vector<128x128xf32>, vector<128x128xf32>, vector<128x128xf32> -> vector<128x128xf32>
    %42 = arith.subf %37, %41 : vector<128x128xf32>
    %c2 = arith.constant 2 : index
    %c0_16 = arith.constant 0 : index
    %43 = vector.load %arg4[%c2, %c0_16] : memref<8x128xf32, #tpu.memory_space<vmem>>, vector<1x128xf32>
    %44 = vector.broadcast %43 : vector<1x128xf32> to vector<128x128xf32>
    %45 = arith.subf %42, %44 : vector<128x128xf32>
    %46 = math.absf %45 : vector<128x128xf32>
    %47 = vector.broadcast %43 : vector<1x128xf32> to vector<128x128xf32>
    %48 = arith.addf %42, %47 : vector<128x128xf32>
    %49 = math.absf %48 : vector<128x128xf32>
    %50 = arith.subf %46, %49 : vector<128x128xf32>
    %cst_17 = arith.constant 5.000000e-01 : f32
    %51 = vector.broadcast %cst_17 : f32 to vector<128x128xf32>
    %52 = arith.mulf %51, %50 : vector<128x128xf32>
    %53 = arith.addf %42, %52 : vector<128x128xf32>
    %cst_18 = arith.constant dense<0.000000e+00> : vector<128x128xf32>
    %54 = tpu.matmul %53, %2, %cst_18 {dimension_numbers = #tpu.dot_dimension_numbers<[1], [1], [0], [0], [0, 0, 1, 0], [], []>} : vector<128x128xf32>, vector<128x128xf32>, vector<128x128xf32> -> vector<128x128xf32>
    %55 = vector.broadcast %6 : vector<128x1xf32> to vector<128x128xf32>
    %56 = arith.addf %54, %55 : vector<128x128xf32>
    %c0_19 = arith.constant 0 : index
    %c0_20 = arith.constant 0 : index
    %57 = vector.load %arg5[%c0_19, %c0_20] : memref<128x128xf32, #tpu.memory_space<vmem>>, vector<128x128xf32>
    tpu.vector_store %arg5[%c0_19, %c0_20], %56 {strides = array<i32>} : memref<128x128xf32, #tpu.memory_space<vmem>>, vector<128x128xf32>,
    return
  }
  func.func @transform_0(%arg0: i32) -> (i32, i32) {
    %c0_i32 = arith.constant 0 : i32
    %c0_i32_0 = arith.constant 0 : i32
    return %arg0, %c0_i32 : i32, i32
  }
  func.func @transform_1(%arg0: i32) -> (i32, i32) {
    %c0_i32 = arith.constant 0 : i32
    %c0_i32_0 = arith.constant 0 : i32
    return %arg0, %c0_i32 : i32, i32
  }
  func.func @transform_2(%arg0: i32) -> (i32, i32) {
    %c0_i32 = arith.constant 0 : i32
    %c0_i32_0 = arith.constant 0 : i32
    %c0_i32_1 = arith.constant 0 : i32
    return %c0_i32, %c0_i32_0 : i32, i32
  }
  func.func @transform_3(%arg0: i32) -> (i32, i32) {
    %c0_i32 = arith.constant 0 : i32
    %c0_i32_0 = arith.constant 0 : i32
    %c0_i32_1 = arith.constant 0 : i32
    return %c0_i32, %c0_i32_0 : i32, i32
  }
  func.func @transform_4(%arg0: i32) -> (i32, i32) {
    %c0_i32 = arith.constant 0 : i32
    %c0_i32_0 = arith.constant 0 : i32
    return %arg0, %c0_i32 : i32, i32
  }
}

</mosaic_0001>

<llo_original>
// kernel: tpu_custom_call.1
$region0: #{tpu_custom_call.1}
  #allocation0 [shape = 'u32[]', space=smem, size = 0x4, offset = 0x4, fixed_abs, tag = 'smem constant byte address 0x4 - core index']
  #allocation1 [shape = 'u32[144,128]{1,0:T(1,128)}', space=vmem, size = 0x12000, scoped, tag = 'internal scratch']
  %s0 = inlined_call_operand.hbm [shape: f32[512,128], index: 0, kind: input, shape index: {}]
  %s1 = inlined_call_operand.hbm [shape: f32[512,128], index: 1, kind: input, shape index: {}]
  %s2 = inlined_call_operand.hbm [shape: f32[128,128], index: 2, kind: input, shape index: {}]
  %s3 = inlined_call_operand.vmem [shape: f32[8,128], index: 3, kind: input, shape index: {}]
  %s4 = inlined_call_operand.hbm [shape: f32[512,128], index: 4, kind: output, shape index: {}]
  %s5 = sld [smem:[#allocation0]]
  $region61: #{tpu_custom_call.1} parent=0
    _
  %s7 = ssub.s32 1, %s5
  %s8 = scalar_select 0, %s7, %s5
  $region1: #{tpu_custom_call.1} parent=0
    #allocation2 [shape = 'u8[131072]{0}', space=vmem, size = 0x20000, scoped, tag = 'input window, operand 0']
    #allocation3 [shape = 's32[2]{0}', space=sflag, size = 0x8, scoped, tag = 'scoped memory for tpu_custom_call.1']
    #allocation4 [shape = 's32[2]{0}', space=sflag, size = 0x8, scoped, tag = 'scoped memory for tpu_custom_call.1']
    #allocation5 [shape = 'u8[131072]{0}', space=vmem, size = 0x20000, scoped, tag = 'input window, operand 1']
    #allocation6 [shape = 's32[2]{0}', space=sflag, size = 0x8, scoped, tag = 'scoped memory for tpu_custom_call.1']
    #allocation7 [shape = 'u8[65536]{0}', space=vmem, size = 0x10000, scoped, tag = 'input window, operand 2, single buffered']
    #allocation8 [shape = 'u8[131072]{0}', space=vmem, size = 0x20000, scoped, tag = 'output window, operand 0']
    %9 = vsyncpa [#allocation3], 0
    %s10 = scalar_lea.sflag [#allocation3], 1
    %11 = vsyncpa %s10, 0
    %12 = vsyncpa [#allocation6], 0
    %s13 = scalar_lea.sflag [#allocation6], 1
    %14 = vsyncpa %s13, 0
    %15 = vsyncpa [#allocation4], 0
    %s16 = scalar_lea.sflag [#allocation4], 1
    %17 = vsyncpa %s16, 0
    loop: start=0, step=1, limit=6
    $region2: #{tpu_custom_call.1} parent=1 // loop_pre_header
      _
    $region3: #{tpu_custom_call.1} parent=1 // loop_header
      %s19 = sphi 0, %s23
      %p20 = scmp.ge.s32.totalorder %s19, 6
      %s29 = sphi 0, %s31
      %s32 = sphi 0, %s29
      %s33 = sphi 0, %s32
      %s49 = sphi 0, %s33
      %s55 = sphi 0, %s57
      %s58 = sphi 0, %s55
      %s59 = sphi 0, %s58
      %s75 = sphi 0, %s59
      %s79 = sphi 0, %s79
      %s81 = sphi 0, %s79
      %s82 = sphi 0, %s81
      %s96 = sphi 0, %s82
      %s100 = sphi 0, %s100
      %s102 = sphi 0, %s100
      %s103 = sphi 0, %s102
      %s117 = sphi 0, %s103
      %s123 = sphi 0, %s125
      %s126 = sphi 0, %s123
      %s127 = sphi 0, %s126
      %s143 = sphi 0, %s127
    $region4: #{tpu_custom_call.1} parent=1 // loop_header_branch
      %22 = sbr.rel (%p20) target = $region8
    $region5: #{tpu_custom_call.1} parent=1 // loop_body
      %s24 = ssub.s32 %s19, 1
      %s25 = ssub.s32 %s19, 2
      %s26 = sadd.s32 %s19, 1
      %s27 = ssub.s32 %s19, %s26
      %p28 = scmp.eq.s32.totalorder %s27, 0
      %s30 = sadd.s32 %s29, 1
      %s31 = scalar_select %p28, %s29, %s30
      %p34 = pneg %p28
      %p35 = scmp.eq.s32.totalorder %s19, 3
      %p36 = por %p34, %p35
      %p37 = scmp.ne.s32.totalorder %s29, %s32
      %p38 = scmp.eq.s32.totalorder %s19, 0
      %p39 = por %p37, %p38
      %p40 = scmp.ne.s32.totalorder %s29, %s32
      %p41 = scmp.eq.s32.totalorder %s24, 3
      %p42 = por %p40, %p41
      %p43 = scmp.ne.s32.totalorder %s32, %s33
      %p44 = scmp.eq.s32.totalorder %s24, 0
      %p45 = por %p43, %p44
      %p46 = scmp.ne.s32.totalorder %s32, %s33
      %p47 = scmp.eq.s32.totalorder %s25, 3
      %p48 = por %p46, %p47
      %p50 = scmp.ne.s32.totalorder %s33, %s49
      %p51 = scmp.eq.s32.totalorder %s25, 0
      %p52 = por %p50, %p51
      %s53 = ssub.s32 %s19, %s26
      %p54 = scmp.eq.s32.totalorder %s53, 0
      %s56 = sadd.s32 %s55, 1
      %s57 = scalar_select %p54, %s55, %s56
      %p60 = pneg %p54
      %p61 = scmp.eq.s32.totalorder %s19, 3
      %p62 = por %p60, %p61
      %p63 = scmp.ne.s32.totalorder %s55, %s58
      %p64 = scmp.eq.s32.totalorder %s19, 0
      %p65 = por %p63, %p64
      %p66 = scmp.ne.s32.totalorder %s55, %s58
      %p67 = scmp.eq.s32.totalorder %s24, 3
      %p68 = por %p66, %p67
      %p69 = scmp.ne.s32.totalorder %s58, %s59
      %p70 = scmp.eq.s32.totalorder %s24, 0
      %p71 = por %p69, %p70
      %p72 = scmp.ne.s32.totalorder %s58, %s59
      %p73 = scmp.eq.s32.totalorder %s25, 3
      %p74 = por %p72, %p73
      %p76 = scmp.ne.s32.totalorder %s59, %s75
      %p77 = scmp.eq.s32.totalorder %s25, 0
      %p78 = por %p76, %p77
      %s80 = sadd.s32 %s79, 1
      %p83 = scmp.eq.s32.totalorder %s19, 3
      %p84 = scmp.ne.s32.totalorder %s79, %s81
      %p85 = scmp.eq.s32.totalorder %s19, 0
      %p86 = por %p84, %p85
      %p87 = scmp.ne.s32.totalorder %s79, %s81
      %p88 = scmp.eq.s32.totalorder %s24, 3
      %p89 = por %p87, %p88
      %p90 = scmp.ne.s32.totalorder %s81, %s82
      %p91 = scmp.eq.s32.totalorder %s24, 0
      %p92 = por %p90, %p91
      %p93 = scmp.ne.s32.totalorder %s81, %s82
      %p94 = scmp.eq.s32.totalorder %s25, 3
      %p95 = por %p93, %p94
      %p97 = scmp.ne.s32.totalorder %s82, %s96
      %p98 = scmp.eq.s32.totalorder %s25, 0
      %p99 = por %p97, %p98
      %s101 = sadd.s32 %s100, 1
      %p104 = scmp.eq.s32.totalorder %s19, 3
      %p105 = scmp.ne.s32.totalorder %s100, %s102
      %p106 = scmp.eq.s32.totalorder %s19, 0
      %p107 = por %p105, %p106
      %p108 = scmp.ne.s32.totalorder %s100, %s102
      %p109 = scmp.eq.s32.totalorder %s24, 3
      %p110 = por %p108, %p109
      %p111 = scmp.ne.s32.totalorder %s102, %s103
      %p112 = scmp.eq.s32.totalorder %s24, 0
      %p113 = por %p111, %p112
      %p114 = scmp.ne.s32.totalorder %s102, %s103
      %p115 = scmp.eq.s32.totalorder %s25, 3
      %p116 = por %p114, %p115
      %p118 = scmp.ne.s32.totalorder %s103, %s117
      %p119 = scmp.eq.s32.totalorder %s25, 0
      %p120 = por %p118, %p119
      %s121 = ssub.s32 %s19, %s26
      %p122 = scmp.eq.s32.totalorder %s121, 0
      %s124 = sadd.s32 %s123, 1
      %s125 = scalar_select %p122, %s123, %s124
      %p128 = pneg %p122
      %p129 = scmp.eq.s32.totalorder %s19, 3
      %p130 = por %p128, %p129
      %p131 = scmp.ne.s32.totalorder %s123, %s126
      %p132 = scmp.eq.s32.totalorder %s19, 0
      %p133 = por %p131, %p132
      %p134 = scmp.ne.s32.totalorder %s123, %s126
      %p135 = scmp.eq.s32.totalorder %s24, 3
      %p136 = por %p134, %p135
      %p137 = scmp.ne.s32.totalorder %s126, %s127
      %p138 = scmp.eq.s32.totalorder %s24, 0
      %p139 = por %p137, %p138
      %p140 = scmp.ne.s32.totalorder %s126, %s127
      %p141 = scmp.eq.s32.totalorder %s25, 3
      %p142 = por %p140, %p141
      %p144 = scmp.ne.s32.totalorder %s127, %s143
      %p145 = scmp.eq.s32.totalorder %s25, 0
      %p146 = por %p144, %p145
      %p147 = scmp.le.s32.totalorder 1, %s19
      %p148 = scmp.lt.s32.totalorder %s19, 5
      %p149 = pnand %p147, %p148
      %p150 = pneg %p149
      // Predicated region
      $region9: #{tpu_custom_call.1} parent=5 // pred_check
        _
      $region10: #{tpu_custom_call.1} parent=5 // pred_check_branch
        %152 = sbr.rel (%p149) target = $region12
      $region11: #{tpu_custom_call.1} parent=5 // pred_region
        %s153 = ssub.s32 %s19, 1
        // Predicated region
        $region13: #{tpu_custom_call.1} parent=11 // pred_check
          %p154 = pneg %p92
        $region14: #{tpu_custom_call.1} parent=11 // pred_check_branch
          %156 = sbr.rel (%p154) target = $region16
        $region15: #{tpu_custom_call.1} parent=11 // pred_region
          %s158 = ssub.s32 2048, 2048
          %159 = vsyncadd [#allocation6], %s158
          %s160 = sshll.u32 [#allocation7], 4
          %s161 = int_to_ptr.vmem [resolvable:$true] %s160
          %166 = dma.hbm_to_vmem [thread:$0]  %s2, 2048, %s161, [#allocation6], 128, 128, 8
        $region16: #{tpu_custom_call.1} parent=11 // pred_fallthru
          _
        // Predicated region
        $region17: #{tpu_custom_call.1} parent=11 // pred_check
          %p167 = pneg %p113
        $region18: #{tpu_custom_call.1} parent=11 // pred_check_branch
          %169 = sbr.rel (%p167) target = $region20
        $region19: #{tpu_custom_call.1} parent=11 // pred_region
          _
        $region20: #{tpu_custom_call.1} parent=11 // pred_fallthru
          _
      $region12: #{tpu_custom_call.1} parent=5 // pred_fallthru
        _
      %p170 = scmp.lt.s32.totalorder %s19, 4
      // Predicated region
      $region21: #{tpu_custom_call.1} parent=5 // pred_check
        %p171 = pneg %p170
      $region22: #{tpu_custom_call.1} parent=5 // pred_check_branch
        %173 = sbr.rel (%p171) target = $region24
      $region23: #{tpu_custom_call.1} parent=5 // pred_region
        // Predicated region
        $region25: #{tpu_custom_call.1} parent=23 // pred_check
          %p174 = pneg %p39
        $region26: #{tpu_custom_call.1} parent=23 // pred_check_branch
          %176 = sbr.rel (%p174) target = $region28
        $region27: #{tpu_custom_call.1} parent=23 // pred_region
          %s177 = sand.u32 %s29, 1
          %s178 = scalar_lea.sflag [#allocation3], %s177
          %s179 = sand.u32 %s29, 1
          %s180 = smul.addr %s179, 128
          %s181 = scalar_lea.vmem [#allocation2], %s180
          %s182 = smul.u32 16, %s19
          %s184 = ssub.s32 2048, 2048
          %185 = vsyncadd %s178, %s184
          %s186 = smul.addr %s182, 128
          %s187 = scalar_lea.hbm %s0, %s186
          %s188 = sshll.u32 %s181, 4
          %s189 = int_to_ptr.vmem [resolvable:$true] %s188
          %194 = dma.hbm_to_vmem [thread:$0]  %s187, 2048, %s189, %s178, 128, 128, 8
        $region28: #{tpu_custom_call.1} parent=23 // pred_fallthru
          _
        // Predicated region
        $region29: #{tpu_custom_call.1} parent=23 // pred_check
          %p195 = pneg %p65
        $region30: #{tpu_custom_call.1} parent=23 // pred_check_branch
          %197 = sbr.rel (%p195) target = $region32
        $region31: #{tpu_custom_call.1} parent=23 // pred_region
          %s198 = sand.u32 %s19, 1
          %s199 = scalar_lea.sflag [#allocation6], %s198
          %s200 = sand.u32 %s55, 1
          %s201 = smul.addr %s200, 128
          %s202 = scalar_lea.vmem [#allocation5], %s201
          %s203 = smul.u32 16, %s19
          %s205 = ssub.s32 2048, 2048
          %206 = vsyncadd %s199, %s205
          %s207 = smul.addr %s203, 128
          %s208 = scalar_lea.hbm %s1, %s207
          %s209 = sshll.u32 %s202, 4
          %s210 = int_to_ptr.vmem [resolvable:$true] %s209
          %215 = dma.hbm_to_vmem [thread:$0]  %s208, 2048, %s210, %s199, 128, 128, 8
        $region32: #{tpu_custom_call.1} parent=23 // pred_fallthru
          _
      $region24: #{tpu_custom_call.1} parent=5 // pred_fallthru
        _
      %p216 = scmp.le.s32.totalorder 1, %s19
      %p217 = scmp.lt.s32.totalorder %s19, 5
      %p218 = pnand %p216, %p217
      %p219 = pneg %p218
      // Predicated region
      $region33: #{tpu_custom_call.1} parent=5 // pred_check
        _
      $region34: #{tpu_custom_call.1} parent=5 // pred_check_branch
        %221 = sbr.rel (%p218) target = $region36
      $region35: #{tpu_custom_call.1} parent=5 // pred_region
        %s222 = ssub.s32 %s19, 1
        %s223 = sand.u32 %s32, 1
        %s224 = scalar_lea.sflag [#allocation3], %s223
        %s225 = sand.u32 %s32, 1
        %s226 = smul.addr %s225, 128
        %s227 = scalar_lea.vmem [#allocation2], %s226
        // Predicated region
        $region37: #{tpu_custom_call.1} parent=35 // pred_check
          %p228 = pneg %p45
        $region38: #{tpu_custom_call.1} parent=35 // pred_check_branch
          %230 = sbr.rel (%p228) target = $region40
        $region39: #{tpu_custom_call.1} parent=35 // pred_region
          %231 = dma.done %s224, 2048
        $region40: #{tpu_custom_call.1} parent=35 // pred_fallthru
          _
        %s232 = sand.u32 %s24, 1
        %s233 = scalar_lea.sflag [#allocation6], %s232
        %s234 = sand.u32 %s58, 1
        %s235 = smul.addr %s234, 128
        %s236 = scalar_lea.vmem [#allocation5], %s235
        // Predicated region
        $region41: #{tpu_custom_call.1} parent=35 // pred_check
          %p237 = pneg %p71
        $region42: #{tpu_custom_call.1} parent=35 // pred_check_branch
          %239 = sbr.rel (%p237) target = $region44
        $region43: #{tpu_custom_call.1} parent=35 // pred_region
          %240 = dma.done %s233, 2048
        $region44: #{tpu_custom_call.1} parent=35 // pred_fallthru
          _
        // Predicated region
        $region45: #{tpu_custom_call.1} parent=35 // pred_check
          %p241 = pneg %p92
        $region46: #{tpu_custom_call.1} parent=35 // pred_check_branch
          %243 = sbr.rel (%p241) target = $region48
        $region47: #{tpu_custom_call.1} parent=35 // pred_region
          %244 = dma.done [#allocation6], 2048
        $region48: #{tpu_custom_call.1} parent=35 // pred_fallthru
          _
        %s245 = sand.u32 %s32, 1
        %s246 = scalar_lea.sflag [#allocation3], %s245
        %s247 = sand.u32 %s32, 1
        %s248 = smul.addr %s247, 128
        %s249 = scalar_lea.vmem [#allocation2], %s248
        %p250 = pneg %p45
        %p251 = pneg %p42
        %s252 = sand.u32 %s24, 1
        %s253 = scalar_lea.sflag [#allocation6], %s252
        %s254 = sand.u32 %s58, 1
        %s255 = smul.addr %s254, 128
        %s256 = scalar_lea.vmem [#allocation5], %s255
        %p257 = pneg %p71
        %p258 = pneg %p68
        %p259 = pneg %p92
        %p260 = pneg %p89
        %p261 = pneg %p113
        %p262 = pneg %p110
        %p263 = pneg %p139
        %p264 = pneg %p136
        %s265 = sand.u32 %s126, 1
        %s266 = scalar_lea.sflag [#allocation4], %s265
        %s267 = sand.u32 %s126, 1
        %s268 = smul.addr %s267, 128
        %s269 = scalar_lea.vmem [#allocation8], %s268
        %s270 = smul.u32 16, %s24
        %s271 = smul.u32 16, %s24
        %s272 = smul.u32 16, %s24
        %v273 = vld [vmem:[%s227] sm:$0xff]
        %v274 = vld [vmem:[%s227 + $0x8] sm:$0xff]
        %v275 = vld [vmem:[%s227 + $0x10] sm:$0xff]
        %v276 = vld [vmem:[%s227 + $0x18] sm:$0xff]
        %v277 = vld [vmem:[%s227 + $0x20] sm:$0xff]
        %v278 = vld [vmem:[%s227 + $0x28] sm:$0xff]
        %v279 = vld [vmem:[%s227 + $0x30] sm:$0xff]
        %v280 = vld [vmem:[%s227 + $0x38] sm:$0xff]
        %v281 = vld [vmem:[%s227 + $0x40] sm:$0xff]
        %v282 = vld [vmem:[%s227 + $0x48] sm:$0xff]
        %v283 = vld [vmem:[%s227 + $0x50] sm:$0xff]
        %v284 = vld [vmem:[%s227 + $0x58] sm:$0xff]
        %v285 = vld [vmem:[%s227 + $0x60] sm:$0xff]
        %v286 = vld [vmem:[%s227 + $0x68] sm:$0xff]
        %v287 = vld [vmem:[%s227 + $0x70] sm:$0xff]
        %v288 = vld [vmem:[%s227 + $0x78] sm:$0xff]
        %v289 = vld [vmem:[%s236] sm:$0xff]
        %v290 = vld [vmem:[%s236 + $0x8] sm:$0xff]
        %v291 = vld [vmem:[%s236 + $0x10] sm:$0xff]
        %v292 = vld [vmem:[%s236 + $0x18] sm:$0xff]
        %v293 = vld [vmem:[%s236 + $0x20] sm:$0xff]
        %v294 = vld [vmem:[%s236 + $0x28] sm:$0xff]
        %v295 = vld [vmem:[%s236 + $0x30] sm:$0xff]
        %v296 = vld [vmem:[%s236 + $0x38] sm:$0xff]
        %v297 = vld [vmem:[%s236 + $0x40] sm:$0xff]
        %v298 = vld [vmem:[%s236 + $0x48] sm:$0xff]
        %v299 = vld [vmem:[%s236 + $0x50] sm:$0xff]
        %v300 = vld [vmem:[%s236 + $0x58] sm:$0xff]
        %v301 = vld [vmem:[%s236 + $0x60] sm:$0xff]
        %v302 = vld [vmem:[%s236 + $0x68] sm:$0xff]
        %v303 = vld [vmem:[%s236 + $0x70] sm:$0xff]
        %v304 = vld [vmem:[%s236 + $0x78] sm:$0xff]
        %v305 = vld [vmem:[#allocation7] sm:$0xff]
        %v306 = vld [vmem:[#allocation7 + $0x8] sm:$0xff]
        %v307 = vld [vmem:[#allocation7 + $0x10] sm:$0xff]
        %v308 = vld [vmem:[#allocation7 + $0x18] sm:$0xff]
        %v309 = vld [vmem:[#allocation7 + $0x20] sm:$0xff]
        %v310 = vld [vmem:[#allocation7 + $0x28] sm:$0xff]
        %v311 = vld [vmem:[#allocation7 + $0x30] sm:$0xff]
        %v312 = vld [vmem:[#allocation7 + $0x38] sm:$0xff]
        %v313 = vld [vmem:[#allocation7 + $0x40] sm:$0xff]
        %v314 = vld [vmem:[#allocation7 + $0x48] sm:$0xff]
        %v315 = vld [vmem:[#allocation7 + $0x50] sm:$0xff]
        %v316 = vld [vmem:[#allocation7 + $0x58] sm:$0xff]
        %v317 = vld [vmem:[#allocation7 + $0x60] sm:$0xff]
        %v318 = vld [vmem:[#allocation7 + $0x68] sm:$0xff]
        %v319 = vld [vmem:[#allocation7 + $0x70] sm:$0xff]
        %v320 = vld [vmem:[#allocation7 + $0x78] sm:$0xff]
        %321 = vadd.xlane.f32.xlu0 %v273
        %v322 = vpop.xlane.xlu0 %321
        %323 = vadd.xlane.f32.xlu0 %v274
        %v324 = vpop.xlane.xlu0 %323
        %325 = vadd.xlane.f32.xlu0 %v275
        %v326 = vpop.xlane.xlu0 %325
        %327 = vadd.xlane.f32.xlu0 %v276
        %v328 = vpop.xlane.xlu0 %327
        %329 = vadd.xlane.f32.xlu0 %v277
        %v330 = vpop.xlane.xlu0 %329
        %331 = vadd.xlane.f32.xlu0 %v278
        %v332 = vpop.xlane.xlu0 %331
        %333 = vadd.xlane.f32.xlu0 %v279
        %v334 = vpop.xlane.xlu0 %333
        %335 = vadd.xlane.f32.xlu0 %v280
        %v336 = vpop.xlane.xlu0 %335
        %337 = vadd.xlane.f32.xlu0 %v281
        %v338 = vpop.xlane.xlu0 %337
        %339 = vadd.xlane.f32.xlu0 %v282
        %v340 = vpop.xlane.xlu0 %339
        %341 = vadd.xlane.f32.xlu0 %v283
        %v342 = vpop.xlane.xlu0 %341
        %343 = vadd.xlane.f32.xlu0 %v284
        %v344 = vpop.xlane.xlu0 %343
        %345 = vadd.xlane.f32.xlu0 %v285
        %v346 = vpop.xlane.xlu0 %345
        %347 = vadd.xlane.f32.xlu0 %v286
        %v348 = vpop.xlane.xlu0 %347
        %349 = vadd.xlane.f32.xlu0 %v287
        %v350 = vpop.xlane.xlu0 %349
        %351 = vadd.xlane.f32.xlu0 %v288
        %v352 = vpop.xlane.xlu0 %351
        %v353 = vmul.f32 %v322, 0.020833334
        %v354 = vmul.f32 %v324, 0.020833334
        %v355 = vmul.f32 %v326, 0.020833334
        %v356 = vmul.f32 %v328, 0.020833334
        %v357 = vmul.f32 %v330, 0.020833334
        %v358 = vmul.f32 %v332, 0.020833334
        %v359 = vmul.f32 %v334, 0.020833334
        %v360 = vmul.f32 %v336, 0.020833334
        %v361 = vmul.f32 %v338, 0.020833334
        %v362 = vmul.f32 %v340, 0.020833334
        %v363 = vmul.f32 %v342, 0.020833334
        %v364 = vmul.f32 %v344, 0.020833334
        %v365 = vmul.f32 %v346, 0.020833334
        %v366 = vmul.f32 %v348, 0.020833334
        %v367 = vmul.f32 %v350, 0.020833334
        %v368 = vmul.f32 %v352, 0.020833334
        %v369 = vsub.f32 %v273, %v353
        %v370 = vsub.f32 %v274, %v354
        %v371 = vsub.f32 %v275, %v355
        %v372 = vsub.f32 %v276, %v356
        %v373 = vsub.f32 %v277, %v357
        %v374 = vsub.f32 %v278, %v358
        %v375 = vsub.f32 %v279, %v359
        %v376 = vsub.f32 %v280, %v360
        %v377 = vsub.f32 %v281, %v361
        %v378 = vsub.f32 %v282, %v362
        %v379 = vsub.f32 %v283, %v363
        %v380 = vsub.f32 %v284, %v364
        %v381 = vsub.f32 %v285, %v365
        %v382 = vsub.f32 %v286, %v366
        %v383 = vsub.f32 %v287, %v367
        %v384 = vsub.f32 %v288, %v368
        %v385 = vmul.f32 %v289, %v369
        %v386 = vmul.f32 %v290, %v370
        %v387 = vmul.f32 %v291, %v371
        %v388 = vmul.f32 %v292, %v372
        %v389 = vmul.f32 %v293, %v373
        %v390 = vmul.f32 %v294, %v374
        %v391 = vmul.f32 %v295, %v375
        %v392 = vmul.f32 %v296, %v376
        %v393 = vmul.f32 %v297, %v377
        %v394 = vmul.f32 %v298, %v378
        %v395 = vmul.f32 %v299, %v379
        %v396 = vmul.f32 %v300, %v380
        %v397 = vmul.f32 %v301, %v381
        %v398 = vmul.f32 %v302, %v382
        %v399 = vmul.f32 %v303, %v383
        %v400 = vmul.f32 %v304, %v384
        %401 = vmatprep.subr.mxu0 0.0
        %402 = vmatpush1.msra.mxu0 %v305
        %403 = vmatprep.subr.mxu0 0.0
        %404 = vmatpush1.msra.mxu0 %v306
        %405 = vmatprep.subr.mxu0 0.0
        %406 = vmatpush1.msra.mxu0 %v307
        %407 = vmatprep.subr.mxu0 0.0
        %408 = vmatpush1.msra.mxu0 %v308
        %409 = vmatprep.subr.mxu0 0.0
        %410 = vmatpush1.msra.mxu0 %v309
        %411 = vmatprep.subr.mxu0 0.0
        %412 = vmatpush1.msra.mxu0 %v310
        %413 = vmatprep.subr.mxu0 0.0
        %414 = vmatpush1.msra.mxu0 %v311
        %415 = vmatprep.subr.mxu0 0.0
        %416 = vmatpush1.msra.mxu0 %v312
        %417 = vmatprep.subr.mxu0 0.0
        %418 = vmatpush1.msra.mxu0 %v313
        %419 = vmatprep.subr.mxu0 0.0
        %420 = vmatpush1.msra.mxu0 %v314
        %421 = vmatprep.subr.mxu0 0.0
        %422 = vmatpush1.msra.mxu0 %v315
        %423 = vmatprep.subr.mxu0 0.0
        %424 = vmatpush1.msra.mxu0 %v316
        %425 = vmatprep.subr.mxu0 0.0
        %426 = vmatpush1.msra.mxu0 %v317
        %427 = vmatprep.subr.mxu0 0.0
        %428 = vmatpush1.msra.mxu0 %v318
        %429 = vmatprep.subr.mxu0 0.0
        %430 = vmatpush1.msra.mxu0 %v319
        %431 = vmatprep.subr.mxu0 0.0
        %432 = vmatpush1.msra.mxu0 %v320
        %433 = vmatprep.subr.mxu0 0.0
        %434 = vmatpush1.msra.mxu0 0.0
        %435 = vmatprep.subr.mxu0 0.0
        %436 = vmatpush1.msra.mxu0 0.0
        %437 = vmatprep.subr.mxu0 0.0
        %438 = vmatpush1.msra.mxu0 0.0
        %439 = vmatprep.subr.mxu0 0.0
        %440 = vmatpush1.msra.mxu0 0.0
        %441 = vmatprep.subr.mxu0 0.0
        %442 = vmatpush1.msra.mxu0 0.0
        %443 = vmatprep.subr.mxu0 0.0
        %444 = vmatpush1.msra.mxu0 0.0
        %445 = vmatprep.subr.mxu0 0.0
        %446 = vmatpush1.msra.mxu0 0.0
        %447 = vmatprep.subr.mxu0 0.0
        %448 = vmatpush1.msra.mxu0 0.0
        %449 = vmatprep.subr.mxu0 0.0
        %450 = vmatpush1.msra.mxu0 0.0
        %451 = vmatprep.subr.mxu0 0.0
        %452 = vmatpush1.msra.mxu0 0.0
        %453 = vmatprep.subr.mxu0 0.0
        %454 = vmatpush1.msra.mxu0 0.0
        %455 = vmatprep.subr.mxu0 0.0
        %456 = vmatpush1.msra.mxu0 0.0
        %457 = vmatprep.subr.mxu0 0.0
        %458 = vmatpush1.msra.mxu0 0.0
        %459 = vmatprep.subr.mxu0 0.0
        %460 = vmatpush1.msra.mxu0 0.0
        %461 = vmatprep.subr.mxu0 0.0
        %462 = vmatpush1.msra.mxu0 0.0
        %463 = vmatprep.subr.mxu0 0.0
        %464 = vmatpush1.msra.mxu0 0.0
        %465 = vmatprep.mubr.f32.mxu0 0.0
        %466 = vmatmul.mubr.f32.gmra.mrb[0].mxu0 %v385
        %v467 = vpop.f32.mrb[0].mxu0
        %v468 = vadd.f32 0.0, %v467
        %v469 = vpop.f32.mrb[0].mxu0
        %470 = vmatprep.mubr.f32.mxu0 0.0
        %471 = vmatmul.mubr.f32.gmra.mrb[0].mxu0 %v386
        %v472 = vpop.f32.mrb[0].mxu0
        %v473 = vadd.f32 0.0, %v472
        %v474 = vpop.f32.mrb[0].mxu0
        %475 = vmatprep.mubr.f32.mxu0 0.0
        %476 = vmatmul.mubr.f32.gmra.mrb[0].mxu0 %v387
        %v477 = vpop.f32.mrb[0].mxu0
        %v478 = vadd.f32 0.0, %v477
        %v479 = vpop.f32.mrb[0].mxu0
        %480 = vmatprep.mubr.f32.mxu0 0.0
        %481 = vmatmul.mubr.f32.gmra.mrb[0].mxu0 %v388
        %v482 = vpop.f32.mrb[0].mxu0
        %v483 = vadd.f32 0.0, %v482
        %v484 = vpop.f32.mrb[0].mxu0
        %485 = vmatprep.mubr.f32.mxu0 0.0
        %486 = vmatmul.mubr.f32.gmra.mrb[0].mxu0 %v389
        %v487 = vpop.f32.mrb[0].mxu0
        %v488 = vadd.f32 0.0, %v487
        %v489 = vpop.f32.mrb[0].mxu0
        %490 = vmatprep.mubr.f32.mxu0 0.0
        %491 = vmatmul.mubr.f32.gmra.mrb[0].mxu0 %v390
        %v492 = vpop.f32.mrb[0].mxu0
        %v493 = vadd.f32 0.0, %v492
        %v494 = vpop.f32.mrb[0].mxu0
        %495 = vmatprep.mubr.f32.mxu0 0.0
        %496 = vmatmul.mubr.f32.gmra.mrb[0].mxu0 %v391
        %v497 = vpop.f32.mrb[0].mxu0
        %v498 = vadd.f32 0.0, %v497
        %v499 = vpop.f32.mrb[0].mxu0
        %500 = vmatprep.mubr.f32.mxu0 0.0
        %501 = vmatmul.mubr.f32.gmra.mrb[0].mxu0 %v392
        %v502 = vpop.f32.mrb[0].mxu0
        %v503 = vadd.f32 0.0, %v502
        %v504 = vpop.f32.mrb[0].mxu0
        %505 = vmatprep.mubr.f32.mxu0 0.0
        %506 = vmatmul.mubr.f32.gmra.mrb[0].mxu0 %v393
        %v507 = vpop.f32.mrb[0].mxu0
        %v508 = vadd.f32 0.0, %v507
        %v509 = vpop.f32.mrb[0].mxu0
        %510 = vmatprep.mubr.f32.mxu0 0.0
        %511 = vmatmul.mubr.f32.gmra.mrb[0].mxu0 %v394
        %v512 = vpop.f32.mrb[0].mxu0
        %v513 = vadd.f32 0.0, %v512
        %v514 = vpop.f32.mrb[0].mxu0
        %515 = vmatprep.mubr.f32.mxu0 0.0
        %516 = vmatmul.mubr.f32.gmra.mrb[0].mxu0 %v395
        %v517 = vpop.f32.mrb[0].mxu0
        %v518 = vadd.f32 0.0, %v517
        %v519 = vpop.f32.mrb[0].mxu0
        %520 = vmatprep.mubr.f32.mxu0 0.0
        %521 = vmatmul.mubr.f32.gmra.mrb[0].mxu0 %v396
        %v522 = vpop.f32.mrb[0].mxu0
        %v523 = vadd.f32 0.0, %v522
        %v524 = vpop.f32.mrb[0].mxu0
        %525 = vmatprep.mubr.f32.mxu0 0.0
        %526 = vmatmul.mubr.f32.gmra.mrb[0].mxu0 %v397
        %v527 = vpop.f32.mrb[0].mxu0
        %v528 = vadd.f32 0.0, %v527
        %v529 = vpop.f32.mrb[0].mxu0
        %530 = vmatprep.mubr.f32.mxu0 0.0
        %531 = vmatmul.mubr.f32.gmra.mrb[0].mxu0 %v398
        %v532 = vpop.f32.mrb[0].mxu0
        %v533 = vadd.f32 0.0, %v532
        %v534 = vpop.f32.mrb[0].mxu0
        %535 = vmatprep.mubr.f32.mxu0 0.0
        %536 = vmatmul.mubr.f32.gmra.mrb[0].mxu0 %v399
        %v537 = vpop.f32.mrb[0].mxu0
        %v538 = vadd.f32 0.0, %v537
        %v539 = vpop.f32.mrb[0].mxu0
        %540 = vmatprep.mubr.f32.mxu0 0.0
        %541 = vmatmul.mubr.f32.gmra.mrb[0].mxu0 %v400
        %v542 = vpop.f32.mrb[0].mxu0
        %v543 = vadd.f32 0.0, %v542
        %v544 = vpop.f32.mrb[0].mxu0
        %545 = vdwg.mxu0
        %v546 = vld [vmem:[%s3] sm:$0x1]
        %v547 = vlaneseq
        %v548 = vshrl.u32 %v547, 7
        %v549 = vsub.s32 0, %v548
        %v550 = vrot.slane %v546, %v549
        %v551 = vsub.f32 %v468, %v550
        %v552 = vsub.f32 %v473, %v550
        %v553 = vsub.f32 %v478, %v550
        %v554 = vsub.f32 %v483, %v550
        %v555 = vsub.f32 %v488, %v550
        %v556 = vsub.f32 %v493, %v550
        %v557 = vsub.f32 %v498, %v550
        %v558 = vsub.f32 %v503, %v550
        %v559 = vsub.f32 %v508, %v550
        %v560 = vsub.f32 %v513, %v550
        %v561 = vsub.f32 %v518, %v550
        %v562 = vsub.f32 %v523, %v550
        %v563 = vsub.f32 %v528, %v550
        %v564 = vsub.f32 %v533, %v550
        %v565 = vsub.f32 %v538, %v550
        %v566 = vsub.f32 %v543, %v550
        %v567 = vand.u32 2147483647, %v551
        %v568 = vand.u32 2147483647, %v552
        %v569 = vand.u32 2147483647, %v553
        %v570 = vand.u32 2147483647, %v554
        %v571 = vand.u32 2147483647, %v555
        %v572 = vand.u32 2147483647, %v556
        %v573 = vand.u32 2147483647, %v557
        %v574 = vand.u32 2147483647, %v558
        %v575 = vand.u32 2147483647, %v559
        %v576 = vand.u32 2147483647, %v560
        %v577 = vand.u32 2147483647, %v561
        %v578 = vand.u32 2147483647, %v562
        %v579 = vand.u32 2147483647, %v563
        %v580 = vand.u32 2147483647, %v564
        %v581 = vand.u32 2147483647, %v565
        %v582 = vand.u32 2147483647, %v566
        %v583 = vadd.f32 %v468, %v550
        %v584 = vadd.f32 %v473, %v550
        %v585 = vadd.f32 %v478, %v550
        %v586 = vadd.f32 %v483, %v550
        %v587 = vadd.f32 %v488, %v550
        %v588 = vadd.f32 %v493, %v550
        %v589 = vadd.f32 %v498, %v550
        %v590 = vadd.f32 %v503, %v550
        %v591 = vadd.f32 %v508, %v550
        %v592 = vadd.f32 %v513, %v550
        %v593 = vadd.f32 %v518, %v550
        %v594 = vadd.f32 %v523, %v550
        %v595 = vadd.f32 %v528, %v550
        %v596 = vadd.f32 %v533, %v550
        %v597 = vadd.f32 %v538, %v550
        %v598 = vadd.f32 %v543, %v550
        %v599 = vand.u32 2147483647, %v583
        %v600 = vand.u32 2147483647, %v584
        %v601 = vand.u32 2147483647, %v585
        %v602 = vand.u32 2147483647, %v586
        %v603 = vand.u32 2147483647, %v587
        %v604 = vand.u32 2147483647, %v588
        %v605 = vand.u32 2147483647, %v589
        %v606 = vand.u32 2147483647, %v590
        %v607 = vand.u32 2147483647, %v591
        %v608 = vand.u32 2147483647, %v592
        %v609 = vand.u32 2147483647, %v593
        %v610 = vand.u32 2147483647, %v594
        %v611 = vand.u32 2147483647, %v595
        %v612 = vand.u32 2147483647, %v596
        %v613 = vand.u32 2147483647, %v597
        %v614 = vand.u32 2147483647, %v598
        %v615 = vsub.f32 %v567, %v599
        %v616 = vsub.f32 %v568, %v600
        %v617 = vsub.f32 %v569, %v601
        %v618 = vsub.f32 %v570, %v602
        %v619 = vsub.f32 %v571, %v603
        %v620 = vsub.f32 %v572, %v604
        %v621 = vsub.f32 %v573, %v605
        %v622 = vsub.f32 %v574, %v606
        %v623 = vsub.f32 %v575, %v607
        %v624 = vsub.f32 %v576, %v608
        %v625 = vsub.f32 %v577, %v609
        %v626 = vsub.f32 %v578, %v610
        %v627 = vsub.f32 %v579, %v611
        %v628 = vsub.f32 %v580, %v612
        %v629 = vsub.f32 %v581, %v613
        %v630 = vsub.f32 %v582, %v614
        %v631 = vmul.f32 %v615, 0.5
        %v632 = vmul.f32 %v616, 0.5
        %v633 = vmul.f32 %v617, 0.5
        %v634 = vmul.f32 %v618, 0.5
        %v635 = vmul.f32 %v619, 0.5
        %v636 = vmul.f32 %v620, 0.5
        %v637 = vmul.f32 %v621, 0.5
        %v638 = vmul.f32 %v622, 0.5
        %v639 = vmul.f32 %v623, 0.5
        %v640 = vmul.f32 %v624, 0.5
        %v641 = vmul.f32 %v625, 0.5
        %v642 = vmul.f32 %v626, 0.5
        %v643 = vmul.f32 %v627, 0.5
        %v644 = vmul.f32 %v628, 0.5
        %v645 = vmul.f32 %v629, 0.5
        %v646 = vmul.f32 %v630, 0.5
        %v647 = vadd.f32 %v468, %v631
        %v648 = vadd.f32 %v473, %v632
        %v649 = vadd.f32 %v478, %v633
        %v650 = vadd.f32 %v483, %v634
        %v651 = vadd.f32 %v488, %v635
        %v652 = vadd.f32 %v493, %v636
        %v653 = vadd.f32 %v498, %v637
        %v654 = vadd.f32 %v503, %v638
        %v655 = vadd.f32 %v508, %v639
        %v656 = vadd.f32 %v513, %v640
        %v657 = vadd.f32 %v518, %v641
        %v658 = vadd.f32 %v523, %v642
        %v659 = vadd.f32 %v528, %v643
        %v660 = vadd.f32 %v533, %v644
        %v661 = vadd.f32 %v538, %v645
        %v662 = vadd.f32 %v543, %v646
        %663 = vmatprep.subr.mxu0 0.0
        %664 = vmatpush1.xpose.msra.mxu0 %v305
        %665 = vmatprep.subr.mxu0 0.0
        %666 = vmatpush1.xpose.msra.mxu0 %v306
        %667 = vmatprep.subr.mxu0 0.0
        %668 = vmatpush1.xpose.msra.mxu0 %v307
        %669 = vmatprep.subr.mxu0 0.0
        %670 = vmatpush1.xpose.msra.mxu0 %v308
        %671 = vmatprep.subr.mxu0 0.0
        %672 = vmatpush1.xpose.msra.mxu0 %v309
        %673 = vmatprep.subr.mxu0 0.0
        %674 = vmatpush1.xpose.msra.mxu0 %v310
        %675 = vmatprep.subr.mxu0 0.0
        %676 = vmatpush1.xpose.msra.mxu0 %v311
        %677 = vmatprep.subr.mxu0 0.0
        %678 = vmatpush1.xpose.msra.mxu0 %v312
        %679 = vmatprep.subr.mxu0 0.0
        %680 = vmatpush1.xpose.msra.mxu0 %v313
        %681 = vmatprep.subr.mxu0 0.0
        %682 = vmatpush1.xpose.msra.mxu0 %v314
        %683 = vmatprep.subr.mxu0 0.0
        %684 = vmatpush1.xpose.msra.mxu0 %v315
        %685 = vmatprep.subr.mxu0 0.0
        %686 = vmatpush1.xpose.msra.mxu0 %v316
        %687 = vmatprep.subr.mxu0 0.0
        %688 = vmatpush1.xpose.msra.mxu0 %v317
        %689 = vmatprep.subr.mxu0 0.0
        %690 = vmatpush1.xpose.msra.mxu0 %v318
        %691 = vmatprep.subr.mxu0 0.0
        %692 = vmatpush1.xpose.msra.mxu0 %v319
        %693 = vmatprep.subr.mxu0 0.0
        %694 = vmatpush1.xpose.msra.mxu0 %v320
        %695 = vmatprep.subr.mxu0 0.0
        %696 = vmatpush1.xpose.msra.mxu0 0.0
        %697 = vmatprep.subr.mxu0 0.0
        %698 = vmatpush1.xpose.msra.mxu0 0.0
        %699 = vmatprep.subr.mxu0 0.0
        %700 = vmatpush1.xpose.msra.mxu0 0.0
        %701 = vmatprep.subr.mxu0 0.0
        %702 = vmatpush1.xpose.msra.mxu0 0.0
        %703 = vmatprep.subr.mxu0 0.0
        %704 = vmatpush1.xpose.msra.mxu0 0.0
        %705 = vmatprep.subr.mxu0 0.0
        %706 = vmatpush1.xpose.msra.mxu0 0.0
        %707 = vmatprep.subr.mxu0 0.0
        %708 = vmatpush1.xpose.msra.mxu0 0.0
        %709 = vmatprep.subr.mxu0 0.0
        %710 = vmatpush1.xpose.msra.mxu0 0.0
        %711 = vmatprep.subr.mxu0 0.0
        %712 = vmatpush1.xpose.msra.mxu0 0.0
        %713 = vmatprep.subr.mxu0 0.0
        %714 = vmatpush1.xpose.msra.mxu0 0.0
        %715 = vmatprep.subr.mxu0 0.0
        %716 = vmatpush1.xpose.msra.mxu0 0.0
        %717 = vmatprep.subr.mxu0 0.0
        %718 = vmatpush1.xpose.msra.mxu0 0.0
        %719 = vmatprep.subr.mxu0 0.0
        %720 = vmatpush1.xpose.msra.mxu0 0.0
        %721 = vmatprep.subr.mxu0 0.0
        %722 = vmatpush1.xpose.msra.mxu0 0.0
        %723 = vmatprep.subr.mxu0 0.0
        %724 = vmatpush1.xpose.msra.mxu0 0.0
        %725 = vmatprep.subr.mxu0 0.0
        %726 = vmatpush1.xpose.msra.mxu0 0.0
        %727 = vmatprep.mubr.f32.mxu0 0.0
        %728 = vmatmul.mubr.f32.gmra.mrb[0].mxu0 %v647
        %v729 = vpop.f32.mrb[0].mxu0
        %v730 = vadd.f32 0.0, %v729
        %v731 = vpop.f32.mrb[0].mxu0
        %732 = vmatprep.mubr.f32.mxu0 0.0
        %733 = vmatmul.mubr.f32.gmra.mrb[0].mxu0 %v648
        %v734 = vpop.f32.mrb[0].mxu0
        %v735 = vadd.f32 0.0, %v734
        %v736 = vpop.f32.mrb[0].mxu0
        %737 = vmatprep.mubr.f32.mxu0 0.0
        %738 = vmatmul.mubr.f32.gmra.mrb[0].mxu0 %v649
        %v739 = vpop.f32.mrb[0].mxu0
        %v740 = vadd.f32 0.0, %v739
        %v741 = vpop.f32.mrb[0].mxu0
        %742 = vmatprep.mubr.f32.mxu0 0.0
        %743 = vmatmul.mubr.f32.gmra.mrb[0].mxu0 %v650
        %v744 = vpop.f32.mrb[0].mxu0
        %v745 = vadd.f32 0.0, %v744
        %v746 = vpop.f32.mrb[0].mxu0
        %747 = vmatprep.mubr.f32.mxu0 0.0
        %748 = vmatmul.mubr.f32.gmra.mrb[0].mxu0 %v651
        %v749 = vpop.f32.mrb[0].mxu0
        %v750 = vadd.f32 0.0, %v749
        %v751 = vpop.f32.mrb[0].mxu0
        %752 = vmatprep.mubr.f32.mxu0 0.0
        %753 = vmatmul.mubr.f32.gmra.mrb[0].mxu0 %v652
        %v754 = vpop.f32.mrb[0].mxu0
        %v755 = vadd.f32 0.0, %v754
        %v756 = vpop.f32.mrb[0].mxu0
        %757 = vmatprep.mubr.f32.mxu0 0.0
        %758 = vmatmul.mubr.f32.gmra.mrb[0].mxu0 %v653
        %v759 = vpop.f32.mrb[0].mxu0
        %v760 = vadd.f32 0.0, %v759
        %v761 = vpop.f32.mrb[0].mxu0
        %762 = vmatprep.mubr.f32.mxu0 0.0
        %763 = vmatmul.mubr.f32.gmra.mrb[0].mxu0 %v654
        %v764 = vpop.f32.mrb[0].mxu0
        %v765 = vadd.f32 0.0, %v764
        %v766 = vpop.f32.mrb[0].mxu0
        %767 = vmatprep.mubr.f32.mxu0 0.0
        %768 = vmatmul.mubr.f32.gmra.mrb[0].mxu0 %v655
        %v769 = vpop.f32.mrb[0].mxu0
        %v770 = vadd.f32 0.0, %v769
        %v771 = vpop.f32.mrb[0].mxu0
        %772 = vmatprep.mubr.f32.mxu0 0.0
        %773 = vmatmul.mubr.f32.gmra.mrb[0].mxu0 %v656
        %v774 = vpop.f32.mrb[0].mxu0
        %v775 = vadd.f32 0.0, %v774
        %v776 = vpop.f32.mrb[0].mxu0
        %777 = vmatprep.mubr.f32.mxu0 0.0
        %778 = vmatmul.mubr.f32.gmra.mrb[0].mxu0 %v657
        %v779 = vpop.f32.mrb[0].mxu0
        %v780 = vadd.f32 0.0, %v779
        %v781 = vpop.f32.mrb[0].mxu0
        %782 = vmatprep.mubr.f32.mxu0 0.0
        %783 = vmatmul.mubr.f32.gmra.mrb[0].mxu0 %v658
        %v784 = vpop.f32.mrb[0].mxu0
        %v785 = vadd.f32 0.0, %v784
        %v786 = vpop.f32.mrb[0].mxu0
        %787 = vmatprep.mubr.f32.mxu0 0.0
        %788 = vmatmul.mubr.f32.gmra.mrb[0].mxu0 %v659
        %v789 = vpop.f32.mrb[0].mxu0
        %v790 = vadd.f32 0.0, %v789
        %v791 = vpop.f32.mrb[0].mxu0
        %792 = vmatprep.mubr.f32.mxu0 0.0
        %793 = vmatmul.mubr.f32.gmra.mrb[0].mxu0 %v660
        %v794 = vpop.f32.mrb[0].mxu0
        %v795 = vadd.f32 0.0, %v794
        %v796 = vpop.f32.mrb[0].mxu0
        %797 = vmatprep.mubr.f32.mxu0 0.0
        %798 = vmatmul.mubr.f32.gmra.mrb[0].mxu0 %v661
        %v799 = vpop.f32.mrb[0].mxu0
        %v800 = vadd.f32 0.0, %v799
        %v801 = vpop.f32.mrb[0].mxu0
        %802 = vmatprep.mubr.f32.mxu0 0.0
        %803 = vmatmul.mubr.f32.gmra.mrb[0].mxu0 %v662
        %v804 = vpop.f32.mrb[0].mxu0
        %v805 = vadd.f32 0.0, %v804
        %v806 = vpop.f32.mrb[0].mxu0
        %807 = vdwg.mxu0
        %v808 = vmul.f32 %v730, %v289
        %v809 = vmul.f32 %v735, %v290
        %v810 = vmul.f32 %v740, %v291
        %v811 = vmul.f32 %v745, %v292
        %v812 = vmul.f32 %v750, %v293
        %v813 = vmul.f32 %v755, %v294
        %v814 = vmul.f32 %v760, %v295
        %v815 = vmul.f32 %v765, %v296
        %v816 = vmul.f32 %v770, %v297
        %v817 = vmul.f32 %v775, %v298
        %v818 = vmul.f32 %v780, %v299
        %v819 = vmul.f32 %v785, %v300
        %v820 = vmul.f32 %v790, %v301
        %v821 = vmul.f32 %v795, %v302
        %v822 = vmul.f32 %v800, %v303
        %v823 = vmul.f32 %v805, %v304
        %v824 = vsub.f32 %v808, %v385
        %v825 = vsub.f32 %v809, %v386
        %v826 = vsub.f32 %v810, %v387
        %v827 = vsub.f32 %v811, %v388
        %v828 = vsub.f32 %v812, %v389
        %v829 = vsub.f32 %v813, %v390
        %v830 = vsub.f32 %v814, %v391
        %v831 = vsub.f32 %v815, %v392
        %v832 = vsub.f32 %v816, %v393
        %v833 = vsub.f32 %v817, %v394
        %v834 = vsub.f32 %v818, %v395
        %v835 = vsub.f32 %v819, %v396
        %v836 = vsub.f32 %v820, %v397
        %v837 = vsub.f32 %v821, %v398
        %v838 = vsub.f32 %v822, %v399
        %v839 = vsub.f32 %v823, %v400
        %840 = vmatprep.subr.mxu0 0.0
        %841 = vmatpush1.msra.mxu0 %v305
        %842 = vmatprep.subr.mxu0 0.0
        %843 = vmatpush1.msra.mxu0 %v306
        %844 = vmatprep.subr.mxu0 0.0
        %845 = vmatpush1.msra.mxu0 %v307
        %846 = vmatprep.subr.mxu0 0.0
        %847 = vmatpush1.msra.mxu0 %v308
        %848 = vmatprep.subr.mxu0 0.0
        %849 = vmatpush1.msra.mxu0 %v309
        %850 = vmatprep.subr.mxu0 0.0
        %851 = vmatpush1.msra.mxu0 %v310
        %852 = vmatprep.subr.mxu0 0.0
        %853 = vmatpush1.msra.mxu0 %v311
        %854 = vmatprep.subr.mxu0 0.0
        %855 = vmatpush1.msra.mxu0 %v312
        %856 = vmatprep.subr.mxu0 0.0
        %857 = vmatpush1.msra.mxu0 %v313
        %858 = vmatprep.subr.mxu0 0.0
        %859 = vmatpush1.msra.mxu0 %v314
        %860 = vmatprep.subr.mxu0 0.0
        %861 = vmatpush1.msra.mxu0 %v315
        %862 = vmatprep.subr.mxu0 0.0
        %863 = vmatpush1.msra.mxu0 %v316
        %864 = vmatprep.subr.mxu0 0.0
        %865 = vmatpush1.msra.mxu0 %v317
        %866 = vmatprep.subr.mxu0 0.0
        %867 = vmatpush1.msra.mxu0 %v318
        %868 = vmatprep.subr.mxu0 0.0
        %869 = vmatpush1.msra.mxu0 %v319
        %870 = vmatprep.subr.mxu0 0.0
        %871 = vmatpush1.msra.mxu0 %v320
        %872 = vmatprep.subr.mxu0 0.0
        %873 = vmatpush1.msra.mxu0 0.0
        %874 = vmatprep.subr.mxu0 0.0
        %875 = vmatpush1.msra.mxu0 0.0
        %876 = vmatprep.subr.mxu0 0.0
        %877 = vmatpush1.msra.mxu0 0.0
        %878 = vmatprep.subr.mxu0 0.0
        %879 = vmatpush1.msra.mxu0 0.0
        %880 = vmatprep.subr.mxu0 0.0
        %881 = vmatpush1.msra.mxu0 0.0
        %882 = vmatprep.subr.mxu0 0.0
        %883 = vmatpush1.msra.mxu0 0.0
        %884 = vmatprep.subr.mxu0 0.0
        %885 = vmatpush1.msra.mxu0 0.0
        %886 = vmatprep.subr.mxu0 0.0
        %887 = vmatpush1.msra.mxu0 0.0
        %888 = vmatprep.subr.mxu0 0.0
        %889 = vmatpush1.msra.mxu0 0.0
        %890 = vmatprep.subr.mxu0 0.0
        %891 = vmatpush1.msra.mxu0 0.0
        %892 = vmatprep.subr.mxu0 0.0
        %893 = vmatpush1.msra.mxu0 0.0
        %894 = vmatprep.subr.mxu0 0.0
        %895 = vmatpush1.msra.mxu0 0.0
        %896 = vmatprep.subr.mxu0 0.0
        %897 = vmatpush1.msra.mxu0 0.0
        %898 = vmatprep.subr.mxu0 0.0
        %899 = vmatpush1.msra.mxu0 0.0
        %900 = vmatprep.subr.mxu0 0.0
        %901 = vmatpush1.msra.mxu0 0.0
        %902 = vmatprep.subr.mxu0 0.0
        %903 = vmatpush1.msra.mxu0 0.0
        %904 = vmatprep.mubr.f32.mxu0 0.0
        %905 = vmatmul.mubr.f32.gmra.mrb[0].mxu0 %v824
        %v906 = vpop.f32.mrb[0].mxu0
        %v907 = vadd.f32 0.0, %v906
        %v908 = vpop.f32.mrb[0].mxu0
        %909 = vmatprep.mubr.f32.mxu0 0.0
        %910 = vmatmul.mubr.f32.gmra.mrb[0].mxu0 %v825
        %v911 = vpop.f32.mrb[0].mxu0
        %v912 = vadd.f32 0.0, %v911
        %v913 = vpop.f32.mrb[0].mxu0
        %914 = vmatprep.mubr.f32.mxu0 0.0
        %915 = vmatmul.mubr.f32.gmra.mrb[0].mxu0 %v826
        %v916 = vpop.f32.mrb[0].mxu0
        %v917 = vadd.f32 0.0, %v916
        %v918 = vpop.f32.mrb[0].mxu0
        %919 = vmatprep.mubr.f32.mxu0 0.0
        %920 = vmatmul.mubr.f32.gmra.mrb[0].mxu0 %v827
        %v921 = vpop.f32.mrb[0].mxu0
        %v922 = vadd.f32 0.0, %v921
        %v923 = vpop.f32.mrb[0].mxu0
        %924 = vmatprep.mubr.f32.mxu0 0.0
        %925 = vmatmul.mubr.f32.gmra.mrb[0].mxu0 %v828
        %v926 = vpop.f32.mrb[0].mxu0
        %v927 = vadd.f32 0.0, %v926
        %v928 = vpop.f32.mrb[0].mxu0
        %929 = vmatprep.mubr.f32.mxu0 0.0
        %930 = vmatmul.mubr.f32.gmra.mrb[0].mxu0 %v829
        %v931 = vpop.f32.mrb[0].mxu0
        %v932 = vadd.f32 0.0, %v931
        %v933 = vpop.f32.mrb[0].mxu0
        %934 = vmatprep.mubr.f32.mxu0 0.0
        %935 = vmatmul.mubr.f32.gmra.mrb[0].mxu0 %v830
        %v936 = vpop.f32.mrb[0].mxu0
        %v937 = vadd.f32 0.0, %v936
        %v938 = vpop.f32.mrb[0].mxu0
        %939 = vmatprep.mubr.f32.mxu0 0.0
        %940 = vmatmul.mubr.f32.gmra.mrb[0].mxu0 %v831
        %v941 = vpop.f32.mrb[0].mxu0
        %v942 = vadd.f32 0.0, %v941
        %v943 = vpop.f32.mrb[0].mxu0
        %944 = vmatprep.mubr.f32.mxu0 0.0
        %945 = vmatmul.mubr.f32.gmra.mrb[0].mxu0 %v832
        %v946 = vpop.f32.mrb[0].mxu0
        %v947 = vadd.f32 0.0, %v946
        %v948 = vpop.f32.mrb[0].mxu0
        %949 = vmatprep.mubr.f32.mxu0 0.0
        %950 = vmatmul.mubr.f32.gmra.mrb[0].mxu0 %v833
        %v951 = vpop.f32.mrb[0].mxu0
        %v952 = vadd.f32 0.0, %v951
        %v953 = vpop.f32.mrb[0].mxu0
        %954 = vmatprep.mubr.f32.mxu0 0.0
        %955 = vmatmul.mubr.f32.gmra.mrb[0].mxu0 %v834
        %v956 = vpop.f32.mrb[0].mxu0
        %v957 = vadd.f32 0.0, %v956
        %v958 = vpop.f32.mrb[0].mxu0
        %959 = vmatprep.mubr.f32.mxu0 0.0
        %960 = vmatmul.mubr.f32.gmra.mrb[0].mxu0 %v835
        %v961 = vpop.f32.mrb[0].mxu0
        %v962 = vadd.f32 0.0, %v961
        %v963 = vpop.f32.mrb[0].mxu0
        %964 = vmatprep.mubr.f32.mxu0 0.0
        %965 = vmatmul.mubr.f32.gmra.mrb[0].mxu0 %v836
        %v966 = vpop.f32.mrb[0].mxu0
        %v967 = vadd.f32 0.0, %v966
        %v968 = vpop.f32.mrb[0].mxu0
        %969 = vmatprep.mubr.f32.mxu0 0.0
        %970 = vmatmul.mubr.f32.gmra.mrb[0].mxu0 %v837
        %v971 = vpop.f32.mrb[0].mxu0
        %v972 = vadd.f32 0.0, %v971
        %v973 = vpop.f32.mrb[0].mxu0
        %974 = vmatprep.mubr.f32.mxu0 0.0
        %975 = vmatmul.mubr.f32.gmra.mrb[0].mxu0 %v838
        %v976 = vpop.f32.mrb[0].mxu0
        %v977 = vadd.f32 0.0, %v976
        %v978 = vpop.f32.mrb[0].mxu0
        %979 = vmatprep.mubr.f32.mxu0 0.0
        %980 = vmatmul.mubr.f32.gmra.mrb[0].mxu0 %v839
        %v981 = vpop.f32.mrb[0].mxu0
        %v982 = vadd.f32 0.0, %v981
        %v983 = vpop.f32.mrb[0].mxu0
        %984 = vdwg.mxu0
        %v985 = vsub.f32 %v647, %v907
        %v986 = vsub.f32 %v648, %v912
        %v987 = vsub.f32 %v649, %v917
        %v988 = vsub.f32 %v650, %v922
        %v989 = vsub.f32 %v651, %v927
        %v990 = vsub.f32 %v652, %v932
        %v991 = vsub.f32 %v653, %v937
        %v992 = vsub.f32 %v654, %v942
        %v993 = vsub.f32 %v655, %v947
        %v994 = vsub.f32 %v656, %v952
        %v995 = vsub.f32 %v657, %v957
        %v996 = vsub.f32 %v658, %v962
        %v997 = vsub.f32 %v659, %v967
        %v998 = vsub.f32 %v660, %v972
        %v999 = vsub.f32 %v661, %v977
        %v1000 = vsub.f32 %v662, %v982
        %v1001 = vld [vmem:[%s3 + $0x1] sm:$0x1]
        %v1002 = vlaneseq
        %v1003 = vshrl.u32 %v1002, 7
        %v1004 = vsub.s32 0, %v1003
        %v1005 = vrot.slane %v1001, %v1004
        %v1006 = vsub.f32 %v985, %v1005
        %v1007 = vsub.f32 %v986, %v1005
        %v1008 = vsub.f32 %v987, %v1005
        %v1009 = vsub.f32 %v988, %v1005
        %v1010 = vsub.f32 %v989, %v1005
        %v1011 = vsub.f32 %v990, %v1005
        %v1012 = vsub.f32 %v991, %v1005
        %v1013 = vsub.f32 %v992, %v1005
        %v1014 = vsub.f32 %v993, %v1005
        %v1015 = vsub.f32 %v994, %v1005
        %v1016 = vsub.f32 %v995, %v1005
        %v1017 = vsub.f32 %v996, %v1005
        %v1018 = vsub.f32 %v997, %v1005
        %v1019 = vsub.f32 %v998, %v1005
        %v1020 = vsub.f32 %v999, %v1005
        %v1021 = vsub.f32 %v1000, %v1005
        %v1022 = vand.u32 2147483647, %v1006
        %v1023 = vand.u32 2147483647, %v1007
        %v1024 = vand.u32 2147483647, %v1008
        %v1025 = vand.u32 2147483647, %v1009
        %v1026 = vand.u32 2147483647, %v1010
        %v1027 = vand.u32 2147483647, %v1011
        %v1028 = vand.u32 2147483647, %v1012
        %v1029 = vand.u32 2147483647, %v1013
        %v1030 = vand.u32 2147483647, %v1014
        %v1031 = vand.u32 2147483647, %v1015
        %v1032 = vand.u32 2147483647, %v1016
        %v1033 = vand.u32 2147483647, %v1017
        %v1034 = vand.u32 2147483647, %v1018
        %v1035 = vand.u32 2147483647, %v1019
        %v1036 = vand.u32 2147483647, %v1020
        %v1037 = vand.u32 2147483647, %v1021
        %v1038 = vadd.f32 %v985, %v1005
        %v1039 = vadd.f32 %v986, %v1005
        %v1040 = vadd.f32 %v987, %v1005
        %v1041 = vadd.f32 %v988, %v1005
        %v1042 = vadd.f32 %v989, %v1005
        %v1043 = vadd.f32 %v990, %v1005
        %v1044 = vadd.f32 %v991, %v1005
        %v1045 = vadd.f32 %v992, %v1005
        %v1046 = vadd.f32 %v993, %v1005
        %v1047 = vadd.f32 %v994, %v1005
        %v1048 = vadd.f32 %v995, %v1005
        %v1049 = vadd.f32 %v996, %v1005
        %v1050 = vadd.f32 %v997, %v1005
        %v1051 = vadd.f32 %v998, %v1005
        %v1052 = vadd.f32 %v999, %v1005
        %v1053 = vadd.f32 %v1000, %v1005
        %v1054 = vand.u32 2147483647, %v1038
        %v1055 = vand.u32 2147483647, %v1039
        %v1056 = vand.u32 2147483647, %v1040
        %v1057 = vand.u32 2147483647, %v1041
        %v1058 = vand.u32 2147483647, %v1042
        %v1059 = vand.u32 2147483647, %v1043
        %v1060 = vand.u32 2147483647, %v1044
        %v1061 = vand.u32 2147483647, %v1045
        %v1062 = vand.u32 2147483647, %v1046
        %v1063 = vand.u32 2147483647, %v1047
        %v1064 = vand.u32 2147483647, %v1048
        %v1065 = vand.u32 2147483647, %v1049
        %v1066 = vand.u32 2147483647, %v1050
        %v1067 = vand.u32 2147483647, %v1051
        %v1068 = vand.u32 2147483647, %v1052
        %v1069 = vand.u32 2147483647, %v1053
        %v1070 = vsub.f32 %v1022, %v1054
        %v1071 = vsub.f32 %v1023, %v1055
        %v1072 = vsub.f32 %v1024, %v1056
        %v1073 = vsub.f32 %v1025, %v1057
        %v1074 = vsub.f32 %v1026, %v1058
        %v1075 = vsub.f32 %v1027, %v1059
        %v1076 = vsub.f32 %v1028, %v1060
        %v1077 = vsub.f32 %v1029, %v1061
        %v1078 = vsub.f32 %v1030, %v1062
        %v1079 = vsub.f32 %v1031, %v1063
        %v1080 = vsub.f32 %v1032, %v1064
        %v1081 = vsub.f32 %v1033, %v1065
        %v1082 = vsub.f32 %v1034, %v1066
        %v1083 = vsub.f32 %v1035, %v1067
        %v1084 = vsub.f32 %v1036, %v1068
        %v1085 = vsub.f32 %v1037, %v1069
        %v1086 = vmul.f32 %v1070, 0.5
        %v1087 = vmul.f32 %v1071, 0.5
        %v1088 = vmul.f32 %v1072, 0.5
        %v1089 = vmul.f32 %v1073, 0.5
        %v1090 = vmul.f32 %v1074, 0.5
        %v1091 = vmul.f32 %v1075, 0.5
        %v1092 = vmul.f32 %v1076, 0.5
        %v1093 = vmul.f32 %v1077, 0.5
        %v1094 = vmul.f32 %v1078, 0.5
        %v1095 = vmul.f32 %v1079, 0.5
        %v1096 = vmul.f32 %v1080, 0.5
        %v1097 = vmul.f32 %v1081, 0.5
        %v1098 = vmul.f32 %v1082, 0.5
        %v1099 = vmul.f32 %v1083, 0.5
        %v1100 = vmul.f32 %v1084, 0.5
        %v1101 = vmul.f32 %v1085, 0.5
        %v1102 = vadd.f32 %v985, %v1086
        %v1103 = vadd.f32 %v986, %v1087
        %v1104 = vadd.f32 %v987, %v1088
        %v1105 = vadd.f32 %v988, %v1089
        %v1106 = vadd.f32 %v989, %v1090
        %v1107 = vadd.f32 %v990, %v1091
        %v1108 = vadd.f32 %v991, %v1092
        %v1109 = vadd.f32 %v992, %v1093
        %v1110 = vadd.f32 %v993, %v1094
        %v1111 = vadd.f32 %v994, %v1095
        %v1112 = vadd.f32 %v995, %v1096
        %v1113 = vadd.f32 %v996, %v1097
        %v1114 = vadd.f32 %v997, %v1098
        %v1115 = vadd.f32 %v998, %v1099
        %v1116 = vadd.f32 %v999, %v1100
        %v1117 = vadd.f32 %v1000, %v1101
        %1118 = vmatprep.subr.mxu0 0.0
        %1119 = vmatpush1.xpose.msra.mxu0 %v305
        %1120 = vmatprep.subr.mxu0 0.0
        %1121 = vmatpush1.xpose.msra.mxu0 %v306
        %1122 = vmatprep.subr.mxu0 0.0
        %1123 = vmatpush1.xpose.msra.mxu0 %v307
        %1124 = vmatprep.subr.mxu0 0.0
        %1125 = vmatpush1.xpose.msra.mxu0 %v308
        %1126 = vmatprep.subr.mxu0 0.0
        %1127 = vmatpush1.xpose.msra.mxu0 %v309
        %1128 = vmatprep.subr.mxu0 0.0
        %1129 = vmatpush1.xpose.msra.mxu0 %v310
        %1130 = vmatprep.subr.mxu0 0.0
        %1131 = vmatpush1.xpose.msra.mxu0 %v311
        %1132 = vmatprep.subr.mxu0 0.0
        %1133 = vmatpush1.xpose.msra.mxu0 %v312
        %1134 = vmatprep.subr.mxu0 0.0
        %1135 = vmatpush1.xpose.msra.mxu0 %v313
        %1136 = vmatprep.subr.mxu0 0.0
        %1137 = vmatpush1.xpose.msra.mxu0 %v314
        %1138 = vmatprep.subr.mxu0 0.0
        %1139 = vmatpush1.xpose.msra.mxu0 %v315
        %1140 = vmatprep.subr.mxu0 0.0
        %1141 = vmatpush1.xpose.msra.mxu0 %v316
        %1142 = vmatprep.subr.mxu0 0.0
        %1143 = vmatpush1.xpose.msra.mxu0 %v317
        %1144 = vmatprep.subr.mxu0 0.0
        %1145 = vmatpush1.xpose.msra.mxu0 %v318
        %1146 = vmatprep.subr.mxu0 0.0
        %1147 = vmatpush1.xpose.msra.mxu0 %v319
        %1148 = vmatprep.subr.mxu0 0.0
        %1149 = vmatpush1.xpose.msra.mxu0 %v320
        %1150 = vmatprep.subr.mxu0 0.0
        %1151 = vmatpush1.xpose.msra.mxu0 0.0
        %1152 = vmatprep.subr.mxu0 0.0
        %1153 = vmatpush1.xpose.msra.mxu0 0.0
        %1154 = vmatprep.subr.mxu0 0.0
        %1155 = vmatpush1.xpose.msra.mxu0 0.0
        %1156 = vmatprep.subr.mxu0 0.0
        %1157 = vmatpush1.xpose.msra.mxu0 0.0
        %1158 = vmatprep.subr.mxu0 0.0
        %1159 = vmatpush1.xpose.msra.mxu0 0.0
        %1160 = vmatprep.subr.mxu0 0.0
        %1161 = vmatpush1.xpose.msra.mxu0 0.0
        %1162 = vmatprep.subr.mxu0 0.0
        %1163 = vmatpush1.xpose.msra.mxu0 0.0
        %1164 = vmatprep.subr.mxu0 0.0
        %1165 = vmatpush1.xpose.msra.mxu0 0.0
        %1166 = vmatprep.subr.mxu0 0.0
        %1167 = vmatpush1.xpose.msra.mxu0 0.0
        %1168 = vmatprep.subr.mxu0 0.0
        %1169 = vmatpush1.xpose.msra.mxu0 0.0
        %1170 = vmatprep.subr.mxu0 0.0
        %1171 = vmatpush1.xpose.msra.mxu0 0.0
        %1172 = vmatprep.subr.mxu0 0.0
        %1173 = vmatpush1.xpose.msra.mxu0 0.0
        %1174 = vmatprep.subr.mxu0 0.0
        %1175 = vmatpush1.xpose.msra.mxu0 0.0
        %1176 = vmatprep.subr.mxu0 0.0
        %1177 = vmatpush1.xpose.msra.mxu0 0.0
        %1178 = vmatprep.subr.mxu0 0.0
        %1179 = vmatpush1.xpose.msra.mxu0 0.0
        %1180 = vmatprep.subr.mxu0 0.0
        %1181 = vmatpush1.xpose.msra.mxu0 0.0
        %1182 = vmatprep.mubr.f32.mxu0 0.0
        %1183 = vmatmul.mubr.f32.gmra.mrb[0].mxu0 %v1102
        %v1184 = vpop.f32.mrb[0].mxu0
        %v1185 = vadd.f32 0.0, %v1184
        %v1186 = vpop.f32.mrb[0].mxu0
        %1187 = vmatprep.mubr.f32.mxu0 0.0
        %1188 = vmatmul.mubr.f32.gmra.mrb[0].mxu0 %v1103
        %v1189 = vpop.f32.mrb[0].mxu0
        %v1190 = vadd.f32 0.0, %v1189
        %v1191 = vpop.f32.mrb[0].mxu0
        %1192 = vmatprep.mubr.f32.mxu0 0.0
        %1193 = vmatmul.mubr.f32.gmra.mrb[0].mxu0 %v1104
        %v1194 = vpop.f32.mrb[0].mxu0
        %v1195 = vadd.f32 0.0, %v1194
        %v1196 = vpop.f32.mrb[0].mxu0
        %1197 = vmatprep.mubr.f32.mxu0 0.0
        %1198 = vmatmul.mubr.f32.gmra.mrb[0].mxu0 %v1105
        %v1199 = vpop.f32.mrb[0].mxu0
        %v1200 = vadd.f32 0.0, %v1199
        %v1201 = vpop.f32.mrb[0].mxu0
        %1202 = vmatprep.mubr.f32.mxu0 0.0
        %1203 = vmatmul.mubr.f32.gmra.mrb[0].mxu0 %v1106
        %v1204 = vpop.f32.mrb[0].mxu0
        %v1205 = vadd.f32 0.0, %v1204
        %v1206 = vpop.f32.mrb[0].mxu0
        %1207 = vmatprep.mubr.f32.mxu0 0.0
        %1208 = vmatmul.mubr.f32.gmra.mrb[0].mxu0 %v1107
        %v1209 = vpop.f32.mrb[0].mxu0
        %v1210 = vadd.f32 0.0, %v1209
        %v1211 = vpop.f32.mrb[0].mxu0
        %1212 = vmatprep.mubr.f32.mxu0 0.0
        %1213 = vmatmul.mubr.f32.gmra.mrb[0].mxu0 %v1108
        %v1214 = vpop.f32.mrb[0].mxu0
        %v1215 = vadd.f32 0.0, %v1214
        %v1216 = vpop.f32.mrb[0].mxu0
        %1217 = vmatprep.mubr.f32.mxu0 0.0
        %1218 = vmatmul.mubr.f32.gmra.mrb[0].mxu0 %v1109
        %v1219 = vpop.f32.mrb[0].mxu0
        %v1220 = vadd.f32 0.0, %v1219
        %v1221 = vpop.f32.mrb[0].mxu0
        %1222 = vmatprep.mubr.f32.mxu0 0.0
        %1223 = vmatmul.mubr.f32.gmra.mrb[0].mxu0 %v1110
        %v1224 = vpop.f32.mrb[0].mxu0
        %v1225 = vadd.f32 0.0, %v1224
        %v1226 = vpop.f32.mrb[0].mxu0
        %1227 = vmatprep.mubr.f32.mxu0 0.0
        %1228 = vmatmul.mubr.f32.gmra.mrb[0].mxu0 %v1111
        %v1229 = vpop.f32.mrb[0].mxu0
        %v1230 = vadd.f32 0.0, %v1229
        %v1231 = vpop.f32.mrb[0].mxu0
        %1232 = vmatprep.mubr.f32.mxu0 0.0
        %1233 = vmatmul.mubr.f32.gmra.mrb[0].mxu0 %v1112
        %v1234 = vpop.f32.mrb[0].mxu0
        %v1235 = vadd.f32 0.0, %v1234
        %v1236 = vpop.f32.mrb[0].mxu0
        %1237 = vmatprep.mubr.f32.mxu0 0.0
        %1238 = vmatmul.mubr.f32.gmra.mrb[0].mxu0 %v1113
        %v1239 = vpop.f32.mrb[0].mxu0
        %v1240 = vadd.f32 0.0, %v1239
        %v1241 = vpop.f32.mrb[0].mxu0
        %1242 = vmatprep.mubr.f32.mxu0 0.0
        %1243 = vmatmul.mubr.f32.gmra.mrb[0].mxu0 %v1114
        %v1244 = vpop.f32.mrb[0].mxu0
        %v1245 = vadd.f32 0.0, %v1244
        %v1246 = vpop.f32.mrb[0].mxu0
        %1247 = vmatprep.mubr.f32.mxu0 0.0
        %1248 = vmatmul.mubr.f32.gmra.mrb[0].mxu0 %v1115
        %v1249 = vpop.f32.mrb[0].mxu0
        %v1250 = vadd.f32 0.0, %v1249
        %v1251 = vpop.f32.mrb[0].mxu0
        %1252 = vmatprep.mubr.f32.mxu0 0.0
        %1253 = vmatmul.mubr.f32.gmra.mrb[0].mxu0 %v1116
        %v1254 = vpop.f32.mrb[0].mxu0
        %v1255 = vadd.f32 0.0, %v1254
        %v1256 = vpop.f32.mrb[0].mxu0
        %1257 = vmatprep.mubr.f32.mxu0 0.0
        %1258 = vmatmul.mubr.f32.gmra.mrb[0].mxu0 %v1117
        %v1259 = vpop.f32.mrb[0].mxu0
        %v1260 = vadd.f32 0.0, %v1259
        %v1261 = vpop.f32.mrb[0].mxu0
        %1262 = vdwg.mxu0
        %v1263 = vmul.f32 %v1185, %v289
        %v1264 = vmul.f32 %v1190, %v290
        %v1265 = vmul.f32 %v1195, %v291
        %v1266 = vmul.f32 %v1200, %v292
        %v1267 = vmul.f32 %v1205, %v293
        %v1268 = vmul.f32 %v1210, %v294
        %v1269 = vmul.f32 %v1215, %v295
        %v1270 = vmul.f32 %v1220, %v296
        %v1271 = vmul.f32 %v1225, %v297
        %v1272 = vmul.f32 %v1230, %v298
        %v1273 = vmul.f32 %v1235, %v299
        %v1274 = vmul.f32 %v1240, %v300
        %v1275 = vmul.f32 %v1245, %v301
        %v1276 = vmul.f32 %v1250, %v302
        %v1277 = vmul.f32 %v1255, %v303
        %v1278 = vmul.f32 %v1260, %v304
        %v1279 = vsub.f32 %v1263, %v385
        %v1280 = vsub.f32 %v1264, %v386
        %v1281 = vsub.f32 %v1265, %v387
        %v1282 = vsub.f32 %v1266, %v388
        %v1283 = vsub.f32 %v1267, %v389
        %v1284 = vsub.f32 %v1268, %v390
        %v1285 = vsub.f32 %v1269, %v391
        %v1286 = vsub.f32 %v1270, %v392
        %v1287 = vsub.f32 %v1271, %v393
        %v1288 = vsub.f32 %v1272, %v394
        %v1289 = vsub.f32 %v1273, %v395
        %v1290 = vsub.f32 %v1274, %v396
        %v1291 = vsub.f32 %v1275, %v397
        %v1292 = vsub.f32 %v1276, %v398
        %v1293 = vsub.f32 %v1277, %v399
        %v1294 = vsub.f32 %v1278, %v400
        %1295 = vmatprep.subr.mxu0 0.0
        %1296 = vmatpush1.msra.mxu0 %v305
        %1297 = vmatprep.subr.mxu0 0.0
        %1298 = vmatpush1.msra.mxu0 %v306
        %1299 = vmatprep.subr.mxu0 0.0
        %1300 = vmatpush1.msra.mxu0 %v307
        %1301 = vmatprep.subr.mxu0 0.0
        %1302 = vmatpush1.msra.mxu0 %v308
        %1303 = vmatprep.subr.mxu0 0.0
        %1304 = vmatpush1.msra.mxu0 %v309
        %1305 = vmatprep.subr.mxu0 0.0
        %1306 = vmatpush1.msra.mxu0 %v310
        %1307 = vmatprep.subr.mxu0 0.0
        %1308 = vmatpush1.msra.mxu0 %v311
        %1309 = vmatprep.subr.mxu0 0.0
        %1310 = vmatpush1.msra.mxu0 %v312
        %1311 = vmatprep.subr.mxu0 0.0
        %1312 = vmatpush1.msra.mxu0 %v313
        %1313 = vmatprep.subr.mxu0 0.0
        %1314 = vmatpush1.msra.mxu0 %v314
        %1315 = vmatprep.subr.mxu0 0.0
        %1316 = vmatpush1.msra.mxu0 %v315
        %1317 = vmatprep.subr.mxu0 0.0
        %1318 = vmatpush1.msra.mxu0 %v316
        %1319 = vmatprep.subr.mxu0 0.0
        %1320 = vmatpush1.msra.mxu0 %v317
        %1321 = vmatprep.subr.mxu0 0.0
        %1322 = vmatpush1.msra.mxu0 %v318
        %1323 = vmatprep.subr.mxu0 0.0
        %1324 = vmatpush1.msra.mxu0 %v319
        %1325 = vmatprep.subr.mxu0 0.0
        %1326 = vmatpush1.msra.mxu0 %v320
        %1327 = vmatprep.subr.mxu0 0.0
        %1328 = vmatpush1.msra.mxu0 0.0
        %1329 = vmatprep.subr.mxu0 0.0
        %1330 = vmatpush1.msra.mxu0 0.0
        %1331 = vmatprep.subr.mxu0 0.0
        %1332 = vmatpush1.msra.mxu0 0.0
        %1333 = vmatprep.subr.mxu0 0.0
        %1334 = vmatpush1.msra.mxu0 0.0
        %1335 = vmatprep.subr.mxu0 0.0
        %1336 = vmatpush1.msra.mxu0 0.0
        %1337 = vmatprep.subr.mxu0 0.0
        %1338 = vmatpush1.msra.mxu0 0.0
        %1339 = vmatprep.subr.mxu0 0.0
        %1340 = vmatpush1.msra.mxu0 0.0
        %1341 = vmatprep.subr.mxu0 0.0
        %1342 = vmatpush1.msra.mxu0 0.0
        %1343 = vmatprep.subr.mxu0 0.0
        %1344 = vmatpush1.msra.mxu0 0.0
        %1345 = vmatprep.subr.mxu0 0.0
        %1346 = vmatpush1.msra.mxu0 0.0
        %1347 = vmatprep.subr.mxu0 0.0
        %1348 = vmatpush1.msra.mxu0 0.0
        %1349 = vmatprep.subr.mxu0 0.0
        %1350 = vmatpush1.msra.mxu0 0.0
        %1351 = vmatprep.subr.mxu0 0.0
        %1352 = vmatpush1.msra.mxu0 0.0
        %1353 = vmatprep.subr.mxu0 0.0
        %1354 = vmatpush1.msra.mxu0 0.0
        %1355 = vmatprep.subr.mxu0 0.0
        %1356 = vmatpush1.msra.mxu0 0.0
        %1357 = vmatprep.subr.mxu0 0.0
        %1358 = vmatpush1.msra.mxu0 0.0
        %1359 = vmatprep.mubr.f32.mxu0 0.0
        %1360 = vmatmul.mubr.f32.gmra.mrb[0].mxu0 %v1279
        %v1361 = vpop.f32.mrb[0].mxu0
        %v1362 = vadd.f32 0.0, %v1361
        %v1363 = vpop.f32.mrb[0].mxu0
        %1364 = vmatprep.mubr.f32.mxu0 0.0
        %1365 = vmatmul.mubr.f32.gmra.mrb[0].mxu0 %v1280
        %v1366 = vpop.f32.mrb[0].mxu0
        %v1367 = vadd.f32 0.0, %v1366
        %v1368 = vpop.f32.mrb[0].mxu0
        %1369 = vmatprep.mubr.f32.mxu0 0.0
        %1370 = vmatmul.mubr.f32.gmra.mrb[0].mxu0 %v1281
        %v1371 = vpop.f32.mrb[0].mxu0
        %v1372 = vadd.f32 0.0, %v1371
        %v1373 = vpop.f32.mrb[0].mxu0
        %1374 = vmatprep.mubr.f32.mxu0 0.0
        %1375 = vmatmul.mubr.f32.gmra.mrb[0].mxu0 %v1282
        %v1376 = vpop.f32.mrb[0].mxu0
        %v1377 = vadd.f32 0.0, %v1376
        %v1378 = vpop.f32.mrb[0].mxu0
        %1379 = vmatprep.mubr.f32.mxu0 0.0
        %1380 = vmatmul.mubr.f32.gmra.mrb[0].mxu0 %v1283
        %v1381 = vpop.f32.mrb[0].mxu0
        %v1382 = vadd.f32 0.0, %v1381
        %v1383 = vpop.f32.mrb[0].mxu0
        %1384 = vmatprep.mubr.f32.mxu0 0.0
        %1385 = vmatmul.mubr.f32.gmra.mrb[0].mxu0 %v1284
        %v1386 = vpop.f32.mrb[0].mxu0
        %v1387 = vadd.f32 0.0, %v1386
        %v1388 = vpop.f32.mrb[0].mxu0
        %1389 = vmatprep.mubr.f32.mxu0 0.0
        %1390 = vmatmul.mubr.f32.gmra.mrb[0].mxu0 %v1285
        %v1391 = vpop.f32.mrb[0].mxu0
        %v1392 = vadd.f32 0.0, %v1391
        %v1393 = vpop.f32.mrb[0].mxu0
        %1394 = vmatprep.mubr.f32.mxu0 0.0
        %1395 = vmatmul.mubr.f32.gmra.mrb[0].mxu0 %v1286
        %v1396 = vpop.f32.mrb[0].mxu0
        %v1397 = vadd.f32 0.0, %v1396
        %v1398 = vpop.f32.mrb[0].mxu0
        %1399 = vmatprep.mubr.f32.mxu0 0.0
        %1400 = vmatmul.mubr.f32.gmra.mrb[0].mxu0 %v1287
        %v1401 = vpop.f32.mrb[0].mxu0
        %v1402 = vadd.f32 0.0, %v1401
        %v1403 = vpop.f32.mrb[0].mxu0
        %1404 = vmatprep.mubr.f32.mxu0 0.0
        %1405 = vmatmul.mubr.f32.gmra.mrb[0].mxu0 %v1288
        %v1406 = vpop.f32.mrb[0].mxu0
        %v1407 = vadd.f32 0.0, %v1406
        %v1408 = vpop.f32.mrb[0].mxu0
        %1409 = vmatprep.mubr.f32.mxu0 0.0
        %1410 = vmatmul.mubr.f32.gmra.mrb[0].mxu0 %v1289
        %v1411 = vpop.f32.mrb[0].mxu0
        %v1412 = vadd.f32 0.0, %v1411
        %v1413 = vpop.f32.mrb[0].mxu0
        %1414 = vmatprep.mubr.f32.mxu0 0.0
        %1415 = vmatmul.mubr.f32.gmra.mrb[0].mxu0 %v1290
        %v1416 = vpop.f32.mrb[0].mxu0
        %v1417 = vadd.f32 0.0, %v1416
        %v1418 = vpop.f32.mrb[0].mxu0
        %1419 = vmatprep.mubr.f32.mxu0 0.0
        %1420 = vmatmul.mubr.f32.gmra.mrb[0].mxu0 %v1291
        %v1421 = vpop.f32.mrb[0].mxu0
        %v1422 = vadd.f32 0.0, %v1421
        %v1423 = vpop.f32.mrb[0].mxu0
        %1424 = vmatprep.mubr.f32.mxu0 0.0
        %1425 = vmatmul.mubr.f32.gmra.mrb[0].mxu0 %v1292
        %v1426 = vpop.f32.mrb[0].mxu0
        %v1427 = vadd.f32 0.0, %v1426
        %v1428 = vpop.f32.mrb[0].mxu0
        %1429 = vmatprep.mubr.f32.mxu0 0.0
        %1430 = vmatmul.mubr.f32.gmra.mrb[0].mxu0 %v1293
        %v1431 = vpop.f32.mrb[0].mxu0
        %v1432 = vadd.f32 0.0, %v1431
        %v1433 = vpop.f32.mrb[0].mxu0
        %1434 = vmatprep.mubr.f32.mxu0 0.0
        %1435 = vmatmul.mubr.f32.gmra.mrb[0].mxu0 %v1294
        %v1436 = vpop.f32.mrb[0].mxu0
        %v1437 = vadd.f32 0.0, %v1436
        %v1438 = vpop.f32.mrb[0].mxu0
        %1439 = vdwg.mxu0
        %v1440 = vsub.f32 %v1102, %v1362
        %v1441 = vsub.f32 %v1103, %v1367
        %v1442 = vsub.f32 %v1104, %v1372
        %v1443 = vsub.f32 %v1105, %v1377
        %v1444 = vsub.f32 %v1106, %v1382
        %v1445 = vsub.f32 %v1107, %v1387
        %v1446 = vsub.f32 %v1108, %v1392
        %v1447 = vsub.f32 %v1109, %v1397
        %v1448 = vsub.f32 %v1110, %v1402
        %v1449 = vsub.f32 %v1111, %v1407
        %v1450 = vsub.f32 %v1112, %v1412
        %v1451 = vsub.f32 %v1113, %v1417
        %v1452 = vsub.f32 %v1114, %v1422
        %v1453 = vsub.f32 %v1115, %v1427
        %v1454 = vsub.f32 %v1116, %v1432
        %v1455 = vsub.f32 %v1117, %v1437
        %v1456 = vld [vmem:[%s3 + $0x2] sm:$0x1]
        %v1457 = vlaneseq
        %v1458 = vshrl.u32 %v1457, 7
        %v1459 = vsub.s32 0, %v1458
        %v1460 = vrot.slane %v1456, %v1459
        %v1461 = vsub.f32 %v1440, %v1460
        %v1462 = vsub.f32 %v1441, %v1460
        %v1463 = vsub.f32 %v1442, %v1460
        %v1464 = vsub.f32 %v1443, %v1460
        %v1465 = vsub.f32 %v1444, %v1460
        %v1466 = vsub.f32 %v1445, %v1460
        %v1467 = vsub.f32 %v1446, %v1460
        %v1468 = vsub.f32 %v1447, %v1460
        %v1469 = vsub.f32 %v1448, %v1460
        %v1470 = vsub.f32 %v1449, %v1460
        %v1471 = vsub.f32 %v1450, %v1460
        %v1472 = vsub.f32 %v1451, %v1460
        %v1473 = vsub.f32 %v1452, %v1460
        %v1474 = vsub.f32 %v1453, %v1460
        %v1475 = vsub.f32 %v1454, %v1460
        %v1476 = vsub.f32 %v1455, %v1460
        %v1477 = vand.u32 2147483647, %v1461
        %v1478 = vand.u32 2147483647, %v1462
        %v1479 = vand.u32 2147483647, %v1463
        %v1480 = vand.u32 2147483647, %v1464
        %v1481 = vand.u32 2147483647, %v1465
        %v1482 = vand.u32 2147483647, %v1466
        %v1483 = vand.u32 2147483647, %v1467
        %v1484 = vand.u32 2147483647, %v1468
        %v1485 = vand.u32 2147483647, %v1469
        %v1486 = vand.u32 2147483647, %v1470
        %v1487 = vand.u32 2147483647, %v1471
        %v1488 = vand.u32 2147483647, %v1472
        %v1489 = vand.u32 2147483647, %v1473
        %v1490 = vand.u32 2147483647, %v1474
        %v1491 = vand.u32 2147483647, %v1475
        %v1492 = vand.u32 2147483647, %v1476
        %v1493 = vadd.f32 %v1440, %v1460
        %v1494 = vadd.f32 %v1441, %v1460
        %v1495 = vadd.f32 %v1442, %v1460
        %v1496 = vadd.f32 %v1443, %v1460
        %v1497 = vadd.f32 %v1444, %v1460
        %v1498 = vadd.f32 %v1445, %v1460
        %v1499 = vadd.f32 %v1446, %v1460
        %v1500 = vadd.f32 %v1447, %v1460
        %v1501 = vadd.f32 %v1448, %v1460
        %v1502 = vadd.f32 %v1449, %v1460
        %v1503 = vadd.f32 %v1450, %v1460
        %v1504 = vadd.f32 %v1451, %v1460
        %v1505 = vadd.f32 %v1452, %v1460
        %v1506 = vadd.f32 %v1453, %v1460
        %v1507 = vadd.f32 %v1454, %v1460
        %v1508 = vadd.f32 %v1455, %v1460
        %v1509 = vand.u32 2147483647, %v1493
        %v1510 = vand.u32 2147483647, %v1494
        %v1511 = vand.u32 2147483647, %v1495
        %v1512 = vand.u32 2147483647, %v1496
        %v1513 = vand.u32 2147483647, %v1497
        %v1514 = vand.u32 2147483647, %v1498
        %v1515 = vand.u32 2147483647, %v1499
        %v1516 = vand.u32 2147483647, %v1500
        %v1517 = vand.u32 2147483647, %v1501
        %v1518 = vand.u32 2147483647, %v1502
        %v1519 = vand.u32 2147483647, %v1503
        %v1520 = vand.u32 2147483647, %v1504
        %v1521 = vand.u32 2147483647, %v1505
        %v1522 = vand.u32 2147483647, %v1506
        %v1523 = vand.u32 2147483647, %v1507
        %v1524 = vand.u32 2147483647, %v1508
        %v1525 = vsub.f32 %v1477, %v1509
        %v1526 = vsub.f32 %v1478, %v1510
        %v1527 = vsub.f32 %v1479, %v1511
        %v1528 = vsub.f32 %v1480, %v1512
        %v1529 = vsub.f32 %v1481, %v1513
        %v1530 = vsub.f32 %v1482, %v1514
        %v1531 = vsub.f32 %v1483, %v1515
        %v1532 = vsub.f32 %v1484, %v1516
        %v1533 = vsub.f32 %v1485, %v1517
        %v1534 = vsub.f32 %v1486, %v1518
        %v1535 = vsub.f32 %v1487, %v1519
        %v1536 = vsub.f32 %v1488, %v1520
        %v1537 = vsub.f32 %v1489, %v1521
        %v1538 = vsub.f32 %v1490, %v1522
        %v1539 = vsub.f32 %v1491, %v1523
        %v1540 = vsub.f32 %v1492, %v1524
        %v1541 = vmul.f32 %v1525, 0.5
        %v1542 = vmul.f32 %v1526, 0.5
        %v1543 = vmul.f32 %v1527, 0.5
        %v1544 = vmul.f32 %v1528, 0.5
        %v1545 = vmul.f32 %v1529, 0.5
        %v1546 = vmul.f32 %v1530, 0.5
        %v1547 = vmul.f32 %v1531, 0.5
        %v1548 = vmul.f32 %v1532, 0.5
        %v1549 = vmul.f32 %v1533, 0.5
        %v1550 = vmul.f32 %v1534, 0.5
        %v1551 = vmul.f32 %v1535, 0.5
        %v1552 = vmul.f32 %v1536, 0.5
        %v1553 = vmul.f32 %v1537, 0.5
        %v1554 = vmul.f32 %v1538, 0.5
        %v1555 = vmul.f32 %v1539, 0.5
        %v1556 = vmul.f32 %v1540, 0.5
        %v1557 = vadd.f32 %v1440, %v1541
        %v1558 = vadd.f32 %v1441, %v1542
        %v1559 = vadd.f32 %v1442, %v1543
        %v1560 = vadd.f32 %v1443, %v1544
        %v1561 = vadd.f32 %v1444, %v1545
        %v1562 = vadd.f32 %v1445, %v1546
        %v1563 = vadd.f32 %v1446, %v1547
        %v1564 = vadd.f32 %v1447, %v1548
        %v1565 = vadd.f32 %v1448, %v1549
        %v1566 = vadd.f32 %v1449, %v1550
        %v1567 = vadd.f32 %v1450, %v1551
        %v1568 = vadd.f32 %v1451, %v1552
        %v1569 = vadd.f32 %v1452, %v1553
        %v1570 = vadd.f32 %v1453, %v1554
        %v1571 = vadd.f32 %v1454, %v1555
        %v1572 = vadd.f32 %v1455, %v1556
        %1573 = vmatprep.subr.mxu0 0.0
        %1574 = vmatpush1.xpose.msra.mxu0 %v305
        %1575 = vmatprep.subr.mxu0 0.0
        %1576 = vmatpush1.xpose.msra.mxu0 %v306
        %1577 = vmatprep.subr.mxu0 0.0
        %1578 = vmatpush1.xpose.msra.mxu0 %v307
        %1579 = vmatprep.subr.mxu0 0.0
        %1580 = vmatpush1.xpose.msra.mxu0 %v308
        %1581 = vmatprep.subr.mxu0 0.0
        %1582 = vmatpush1.xpose.msra.mxu0 %v309
        %1583 = vmatprep.subr.mxu0 0.0
        %1584 = vmatpush1.xpose.msra.mxu0 %v310
        %1585 = vmatprep.subr.mxu0 0.0
        %1586 = vmatpush1.xpose.msra.mxu0 %v311
        %1587 = vmatprep.subr.mxu0 0.0
        %1588 = vmatpush1.xpose.msra.mxu0 %v312
        %1589 = vmatprep.subr.mxu0 0.0
        %1590 = vmatpush1.xpose.msra.mxu0 %v313
        %1591 = vmatprep.subr.mxu0 0.0
        %1592 = vmatpush1.xpose.msra.mxu0 %v314
        %1593 = vmatprep.subr.mxu0 0.0
        %1594 = vmatpush1.xpose.msra.mxu0 %v315
        %1595 = vmatprep.subr.mxu0 0.0
        %1596 = vmatpush1.xpose.msra.mxu0 %v316
        %1597 = vmatprep.subr.mxu0 0.0
        %1598 = vmatpush1.xpose.msra.mxu0 %v317
        %1599 = vmatprep.subr.mxu0 0.0
        %1600 = vmatpush1.xpose.msra.mxu0 %v318
        %1601 = vmatprep.subr.mxu0 0.0
        %1602 = vmatpush1.xpose.msra.mxu0 %v319
        %1603 = vmatprep.subr.mxu0 0.0
        %1604 = vmatpush1.xpose.msra.mxu0 %v320
        %1605 = vmatprep.subr.mxu0 0.0
        %1606 = vmatpush1.xpose.msra.mxu0 0.0
        %1607 = vmatprep.subr.mxu0 0.0
        %1608 = vmatpush1.xpose.msra.mxu0 0.0
        %1609 = vmatprep.subr.mxu0 0.0
        %1610 = vmatpush1.xpose.msra.mxu0 0.0
        %1611 = vmatprep.subr.mxu0 0.0
        %1612 = vmatpush1.xpose.msra.mxu0 0.0
        %1613 = vmatprep.subr.mxu0 0.0
        %1614 = vmatpush1.xpose.msra.mxu0 0.0
        %1615 = vmatprep.subr.mxu0 0.0
        %1616 = vmatpush1.xpose.msra.mxu0 0.0
        %1617 = vmatprep.subr.mxu0 0.0
        %1618 = vmatpush1.xpose.msra.mxu0 0.0
        %1619 = vmatprep.subr.mxu0 0.0
        %1620 = vmatpush1.xpose.msra.mxu0 0.0
        %1621 = vmatprep.subr.mxu0 0.0
        %1622 = vmatpush1.xpose.msra.mxu0 0.0
        %1623 = vmatprep.subr.mxu0 0.0
        %1624 = vmatpush1.xpose.msra.mxu0 0.0
        %1625 = vmatprep.subr.mxu0 0.0
        %1626 = vmatpush1.xpose.msra.mxu0 0.0
        %1627 = vmatprep.subr.mxu0 0.0
        %1628 = vmatpush1.xpose.msra.mxu0 0.0
        %1629 = vmatprep.subr.mxu0 0.0
        %1630 = vmatpush1.xpose.msra.mxu0 0.0
        %1631 = vmatprep.subr.mxu0 0.0
        %1632 = vmatpush1.xpose.msra.mxu0 0.0
        %1633 = vmatprep.subr.mxu0 0.0
        %1634 = vmatpush1.xpose.msra.mxu0 0.0
        %1635 = vmatprep.subr.mxu0 0.0
        %1636 = vmatpush1.xpose.msra.mxu0 0.0
        %1637 = vmatprep.mubr.f32.mxu0 0.0
        %1638 = vmatmul.mubr.f32.gmra.mrb[0].mxu0 %v1557
        %v1639 = vpop.f32.mrb[0].mxu0
        %v1640 = vadd.f32 %v353, %v1639
        %v1641 = vpop.f32.mrb[0].mxu0
        %1642 = vmatprep.mubr.f32.mxu0 0.0
        %1643 = vmatmul.mubr.f32.gmra.mrb[0].mxu0 %v1558
        %v1644 = vpop.f32.mrb[0].mxu0
        %v1645 = vadd.f32 %v354, %v1644
        %v1646 = vpop.f32.mrb[0].mxu0
        %1647 = vmatprep.mubr.f32.mxu0 0.0
        %1648 = vmatmul.mubr.f32.gmra.mrb[0].mxu0 %v1559
        %v1649 = vpop.f32.mrb[0].mxu0
        %v1650 = vadd.f32 %v355, %v1649
        %v1651 = vpop.f32.mrb[0].mxu0
        %1652 = vmatprep.mubr.f32.mxu0 0.0
        %1653 = vmatmul.mubr.f32.gmra.mrb[0].mxu0 %v1560
        %v1654 = vpop.f32.mrb[0].mxu0
        %v1655 = vadd.f32 %v356, %v1654
        %v1656 = vpop.f32.mrb[0].mxu0
        %1657 = vmatprep.mubr.f32.mxu0 0.0
        %1658 = vmatmul.mubr.f32.gmra.mrb[0].mxu0 %v1561
        %v1659 = vpop.f32.mrb[0].mxu0
        %v1660 = vadd.f32 %v357, %v1659
        %v1661 = vpop.f32.mrb[0].mxu0
        %1662 = vmatprep.mubr.f32.mxu0 0.0
        %1663 = vmatmul.mubr.f32.gmra.mrb[0].mxu0 %v1562
        %v1664 = vpop.f32.mrb[0].mxu0
        %v1665 = vadd.f32 %v358, %v1664
        %v1666 = vpop.f32.mrb[0].mxu0
        %1667 = vmatprep.mubr.f32.mxu0 0.0
        %1668 = vmatmul.mubr.f32.gmra.mrb[0].mxu0 %v1563
        %v1669 = vpop.f32.mrb[0].mxu0
        %v1670 = vadd.f32 %v359, %v1669
        %v1671 = vpop.f32.mrb[0].mxu0
        %1672 = vmatprep.mubr.f32.mxu0 0.0
        %1673 = vmatmul.mubr.f32.gmra.mrb[0].mxu0 %v1564
        %v1674 = vpop.f32.mrb[0].mxu0
        %v1675 = vadd.f32 %v360, %v1674
        %v1676 = vpop.f32.mrb[0].mxu0
        %1677 = vmatprep.mubr.f32.mxu0 0.0
        %1678 = vmatmul.mubr.f32.gmra.mrb[0].mxu0 %v1565
        %v1679 = vpop.f32.mrb[0].mxu0
        %v1680 = vadd.f32 %v361, %v1679
        %v1681 = vpop.f32.mrb[0].mxu0
        %1682 = vmatprep.mubr.f32.mxu0 0.0
        %1683 = vmatmul.mubr.f32.gmra.mrb[0].mxu0 %v1566
        %v1684 = vpop.f32.mrb[0].mxu0
        %v1685 = vadd.f32 %v362, %v1684
        %v1686 = vpop.f32.mrb[0].mxu0
        %1687 = vmatprep.mubr.f32.mxu0 0.0
        %1688 = vmatmul.mubr.f32.gmra.mrb[0].mxu0 %v1567
        %v1689 = vpop.f32.mrb[0].mxu0
        %v1690 = vadd.f32 %v363, %v1689
        %v1691 = vpop.f32.mrb[0].mxu0
        %1692 = vmatprep.mubr.f32.mxu0 0.0
        %1693 = vmatmul.mubr.f32.gmra.mrb[0].mxu0 %v1568
        %v1694 = vpop.f32.mrb[0].mxu0
        %v1695 = vadd.f32 %v364, %v1694
        %v1696 = vpop.f32.mrb[0].mxu0
        %1697 = vmatprep.mubr.f32.mxu0 0.0
        %1698 = vmatmul.mubr.f32.gmra.mrb[0].mxu0 %v1569
        %v1699 = vpop.f32.mrb[0].mxu0
        %v1700 = vadd.f32 %v365, %v1699
        %v1701 = vpop.f32.mrb[0].mxu0
        %1702 = vmatprep.mubr.f32.mxu0 0.0
        %1703 = vmatmul.mubr.f32.gmra.mrb[0].mxu0 %v1570
        %v1704 = vpop.f32.mrb[0].mxu0
        %v1705 = vadd.f32 %v366, %v1704
        %v1706 = vpop.f32.mrb[0].mxu0
        %1707 = vmatprep.mubr.f32.mxu0 0.0
        %1708 = vmatmul.mubr.f32.gmra.mrb[0].mxu0 %v1571
        %v1709 = vpop.f32.mrb[0].mxu0
        %v1710 = vadd.f32 %v367, %v1709
        %v1711 = vpop.f32.mrb[0].mxu0
        %1712 = vmatprep.mubr.f32.mxu0 0.0
        %1713 = vmatmul.mubr.f32.gmra.mrb[0].mxu0 %v1572
        %v1714 = vpop.f32.mrb[0].mxu0
        %v1715 = vadd.f32 %v368, %v1714
        %v1716 = vpop.f32.mrb[0].mxu0
        %1717 = vdwg.mxu0
        %1718 = vst [vmem:[%s269] sm:$0xff] %v1640
        %1719 = vst [vmem:[%s269 + $0x8] sm:$0xff] %v1645
        %1720 = vst [vmem:[%s269 + $0x10] sm:$0xff] %v1650
        %1721 = vst [vmem:[%s269 + $0x18] sm:$0xff] %v1655
        %1722 = vst [vmem:[%s269 + $0x20] sm:$0xff] %v1660
        %1723 = vst [vmem:[%s269 + $0x28] sm:$0xff] %v1665
        %1724 = vst [vmem:[%s269 + $0x30] sm:$0xff] %v1670
        %1725 = vst [vmem:[%s269 + $0x38] sm:$0xff] %v1675
        %1726 = vst [vmem:[%s269 + $0x40] sm:$0xff] %v1680
        %1727 = vst [vmem:[%s269 + $0x48] sm:$0xff] %v1685
        %1728 = vst [vmem:[%s269 + $0x50] sm:$0xff] %v1690
        %1729 = vst [vmem:[%s269 + $0x58] sm:$0xff] %v1695
        %1730 = vst [vmem:[%s269 + $0x60] sm:$0xff] %v1700
        %1731 = vst [vmem:[%s269 + $0x68] sm:$0xff] %v1705
        %1732 = vst [vmem:[%s269 + $0x70] sm:$0xff] %v1710
        %1733 = vst [vmem:[%s269 + $0x78] sm:$0xff] %v1715
        %s1734 = sand.u32 %s126, 1
        %s1735 = scalar_lea.sflag [#allocation4], %s1734
        %s1736 = sand.u32 %s126, 1
        %s1737 = smul.addr %s1736, 128
        %s1738 = scalar_lea.vmem [#allocation8], %s1737
        // Predicated region
        $region49: #{tpu_custom_call.1} parent=35 // pred_check
          %p1739 = pneg %p136
        $region50: #{tpu_custom_call.1} parent=35 // pred_check_branch
          %1741 = sbr.rel (%p1739) target = $region52
        $region51: #{tpu_custom_call.1} parent=35 // pred_region
          %s1742 = smul.u32 16, %s24
          %s1744 = ssub.s32 2048, 2048
          %1745 = vsyncadd %s1735, %s1744
          %s1746 = smul.addr %s1742, 128
          %s1747 = scalar_lea.hbm %s4, %s1746
          %s1748 = sshll.u32 %s1738, 4
          %s1749 = int_to_ptr.vmem [resolvable:$true] %s1748
          %1754 = dma.vmem_to_hbm [thread:$0]  %s1749, 2048, %s1747, %s1735, 128, 128, 8
        $region52: #{tpu_custom_call.1} parent=35 // pred_fallthru
          _
      $region36: #{tpu_custom_call.1} parent=5 // pred_fallthru
        _
      %p1755 = scmp.le.s32.totalorder 2, %s19
      // Predicated region
      $region53: #{tpu_custom_call.1} parent=5 // pred_check
        %p1756 = pneg %p1755
      $region54: #{tpu_custom_call.1} parent=5 // pred_check_branch
        %1758 = sbr.rel (%p1756) target = $region56
      $region55: #{tpu_custom_call.1} parent=5 // pred_region
        %s1759 = ssub.s32 %s19, 2
        // Predicated region
        $region57: #{tpu_custom_call.1} parent=55 // pred_check
          %p1760 = pneg %p142
        $region58: #{tpu_custom_call.1} parent=55 // pred_check_branch
          %1762 = sbr.rel (%p1760) target = $region60
        $region59: #{tpu_custom_call.1} parent=55 // pred_region
          %s1763 = sand.u32 %s127, 1
          %s1764 = scalar_lea.sflag [#allocation4], %s1763
          %s1765 = sand.u32 %s127, 1
          %s1766 = smul.addr %s1765, 128
          %s1767 = scalar_lea.vmem [#allocation8], %s1766
          %1768 = dma.done %s1764, 2048
        $region60: #{tpu_custom_call.1} parent=55 // pred_fallthru
          _
      $region56: #{tpu_custom_call.1} parent=5 // pred_fallthru
        _
    $region6: #{tpu_custom_call.1} parent=1 // loop_footer
      %s23 = sadd.s32 1, %s19
    $region7: #{tpu_custom_call.1} parent=1 // loop_footer_branch
      %18 = sbr.rel target = $region3
    $region8: #{tpu_custom_call.1} parent=1 // loop_exit
      _
    %1769 = vsyncpa [#allocation3], 1
    %s1770 = scalar_lea.sflag [#allocation3], 1
    %1771 = vsyncpa %s1770, 1
    %1772 = vsyncpa [#allocation6], 1
    %s1773 = scalar_lea.sflag [#allocation6], 1
    %1774 = vsyncpa %s1773, 1
    %1775 = vsyncpa [#allocation4], 1
    %s1776 = scalar_lea.sflag [#allocation4], 1
    %1777 = vsyncpa %s1776, 1

</llo_original>
